<compile_context>
chip_gen: v5e
topology: v5e:2x2
jax: 0.10.0
libtpu: 0.0.40
codegen_flags: <defaults>
</compile_context>

<pallas_src>
import functools

import jax
import jax.numpy as jnp
from jax import lax
from jax.experimental import pallas as pl
from jax.experimental.pallas import tpu as pltpu


# ------------------------------ fused kernel --------------------------------

def _fused_forward_kernel(xpe_ref, xpo_ref, tgt_ref,
                          w1_ref, s1_ref, w2_ref, s2_ref, sdn_ref,
                          w1f_ref, w1t_ref, b1_ref, w2fc_ref, b2_ref,
                          o_ref, *, bblk, p1sz, p2):
    """Whole MulChanConvNet forward for one block of `bblk` samples."""
    f32 = jnp.float32
    c1, c2 = 16, 32
    k1 = xpe_ref.shape[-1]
    rows = bblk * p1sz
    l1m = w2_ref.shape[1]          # (wo1 - 1) * c1 : stretched pooled-1 lanes
    l2m = w1f_ref.shape[1]         # (2*p2 - 1) * c2: stretched pooled-2 lanes

    def mm(a, b):
        return jnp.dot(a, b, preferred_element_type=f32)

    # ---- layer 1: conv(1->16, k2, s1, p1) + BN + ReLU + 2x2 maxpool --------
    # Even / odd conv-output rows come from the glue-side row-parity split of
    # the padded input, so the 2x2 row pooling is a whole-slab max.
    a_e0 = xpe_ref[:, 0:p1sz, :].reshape(rows, k1)        # padded rows 2r
    a_o = xpo_ref[:, 0:p1sz, :].reshape(rows, k1)         # padded rows 2r + 1
    a_e1 = xpe_ref[:, 1:p1sz + 1, :].reshape(rows, k1)    # padded rows 2r + 2
    w1_0, w1_1 = w1_ref[0], w1_ref[1]
    c1_even = mm(a_e0, w1_0) + mm(a_o, w1_1)              # conv1 rows 2r
    c1_odd = mm(a_o, w1_0) + mm(a_e1, w1_1)               # conv1 rows 2r + 1
    rm = jnp.maximum(jnp.maximum(c1_even, c1_odd) + s1_ref[...], 0.0)
    # Column-pair max (lanes are j*16 + c).  Odd-j lanes hold garbage; the
    # conv2 Toeplitz weights have zero rows there, so no compaction needed.
    p1s = jnp.maximum(rm[:, :l1m], rm[:, c1:c1 + l1m])    # (rows, l1m)

    # ---- layer 2: conv(16->32, k2, s1, p1) + BN + ReLU ---------------------
    # Toeplitz-along-j matmuls over the stretched pooled-1 map; the per-sample
    # one-row shift (top zero-padding row) is a small selection matmul.
    p1_dn = mm(sdn_ref[...], p1s)                         # row i2-1 (0 at i2=0)
    r2 = jnp.maximum(mm(p1_dn, w2_ref[0]) + mm(p1s, w2_ref[1]) + s2_ref[...],
                     0.0)                                 # (rows, 2*p2*c2)

    # ---- 2x2 maxpool + flatten + fc1 + ReLU + fc2 --------------------------
    jm = jnp.maximum(r2[:, :l2m], r2[:, c2:c2 + l2m])     # column-pair max
    jm3 = jm.reshape(bblk, p1sz, l2m)
    h = mm(tgt_ref[...], w1t_ref[...]) + b1_ref[...]      # target part of fc1
    for p in range(p2):                                   # row pairs + features
        rp = jnp.maximum(jm3[:, 2 * p, :], jm3[:, 2 * p + 1, :])
        h = h + mm(rp, w1f_ref[p])
    h = jnp.maximum(h, 0.0)
    o_ref[...] = mm(h, w2fc_ref[...]) + b2_ref[...]


# --------------------------------- wrapper ----------------------------------

def mul_chan_convnet_pallas(params, sensor_nchw, target, eps=1e-5, block_b=8):
    f32 = jnp.float32
    n, cin, hgt, wid = sensor_nchw.shape
    assert cin == 1 and hgt == wid
    wo1 = wid + 1                  # conv1 output spatial (pad=1, k=2, s=1)
    p1sz = wo1 // 2                # pool1 output spatial
    p2 = (p1sz + 1) // 2           # pool2 output spatial
    c1, c2 = 16, 32
    nh = params['fc1_w'].shape[0]
    na = params['fc2_w'].shape[0]
    feat = p2 * p2 * c2
    assert params['fc1_w'].shape[1] == feat + 2
    # Clean (8,128) tilings assume the pooled-1 map size is a multiple of 8
    # (true for the canonical odd input widths, e.g. 15).
    assert p1sz % 8 == 0 and 2 * p2 == p1sz

    bblk = block_b
    nb = ((n + bblk - 1) // bblk) * bblk

    # ---------------- input glue: pad, split rows by parity -----------------
    k1 = ((wid + 2 + 7) // 8) * 8                     # conv1 matmul K (padded)
    xp = jnp.pad(sensor_nchw[:, 0].astype(f32),
                 ((0, nb - n), (1, 1), (1, k1 - wid - 1)))
    xpe = xp[:, 0::2, :][:, :p1sz + 1, :]             # padded rows 0, 2, 4, ...
    xpo = xp[:, 1::2, :][:, :p1sz, :]                 # padded rows 1, 3, 5, ...
    tgt = jnp.pad(target.astype(f32), ((0, nb - n), (0, 0)))

    # -------- fold inference-mode BatchNorm into conv weights / biases ------
    scale1 = params['bn1_gamma'] / jnp.sqrt(params['bn1_var'] + eps)
    w1c = jnp.transpose(params['conv1_w'][:, 0] * scale1[:, None, None],
                        (1, 2, 0)).astype(f32)                      # (2,2,c1)
    s1 = params['bn1_beta'] + (params['conv1_b'] - params['bn1_mean']) * scale1
    scale2 = params['bn2_gamma'] / jnp.sqrt(params['bn2_var'] + eps)
    w2c = jnp.transpose(params['conv2_w'] * scale2[:, None, None, None],
                        (2, 3, 1, 0)).astype(f32)                   # (2,2,c1,c2)
    s2 = params['bn2_beta'] + (params['conv2_b'] - params['bn2_mean']) * scale2

    # -------- conv1 as Toeplitz-along-j matmuls: (rows,k1) @ (k1, wo1*c1) ---
    l1 = wo1 * c1
    jp = jnp.arange(k1)[:, None]
    jj = jnp.arange(wo1)[None, :]
    t0 = (jp == jj).astype(f32)
    t1 = (jp == jj + 1).astype(f32)
    w1 = (t0[None, :, :, None] * w1c[:, 0][:, None, None, :]
          + t1[None, :, :, None] * w1c[:, 1][:, None, None, :]
          ).reshape(2, k1, l1)
    s1t = jnp.tile(s1.astype(f32), wo1).reshape(1, l1)

    # -------- conv2 as Toeplitz matmuls over the j-stretched pooled-1 map ---
    l1m = (wo1 - 1) * c1
    l2 = 2 * p2 * c2
    js = jnp.arange(wo1 - 1)[:, None]
    j2 = jnp.arange(2 * p2)[None, :]
    n0 = (js == 2 * (j2 - 1)).astype(f32)             # dj = 0 tap
    n1 = (js == 2 * j2).astype(f32)                   # dj = 1 tap
    w2 = (n0[None, :, None, :, None] * w2c[:, 0][:, None, :, None, :]
          + n1[None, :, None, :, None] * w2c[:, 1][:, None, :, None, :]
          ).reshape(2, l1m, l2)
    s2t = jnp.tile(s2.astype(f32), 2 * p2).reshape(1, l2)

    # per-sample shift-down-one-row selection (row 0 -> conv2 top zero pad)
    mrow = jnp.arange(bblk * p1sz)
    sdn = ((mrow[:, None] == mrow[None, :] + 1)
           & (mrow[:, None] % p1sz != 0)).astype(f32)

    # -------- fc head: permute fc1 features to (p, stretched-j2, co) order --
    l2m = (2 * p2 - 1) * c2
    fw = params['fc1_w'][:, :feat].reshape(nh, c2, p2, p2)
    fw = jnp.transpose(fw, (2, 3, 1, 0)).astype(f32)             # (p, q, co, nh)
    w1f = jnp.zeros((p2, 2 * p2 - 1, c2, nh), f32).at[:, 0::2].set(fw)
    w1f = w1f.reshape(p2, l2m, nh)
    w1t = params['fc1_w'][:, feat:].T.astype(f32)                # (2, nh)
    b1 = params['fc1_b'].reshape(1, nh).astype(f32)
    w2fc = params['fc2_w'].T.astype(f32)                         # (nh, na)
    b2 = params['fc2_b'].reshape(1, na).astype(f32)

    kernel = functools.partial(_fused_forward_kernel,
                               bblk=bblk, p1sz=p1sz, p2=p2)

    def const_spec(a):
        return pl.BlockSpec(a.shape, lambda i, nd=a.ndim: (0,) * nd)

    out = pl.pallas_call(
        kernel,
        out_shape=jax.ShapeDtypeStruct((nb, na), f32),
        grid=(nb // bblk,),
        in_specs=[
            pl.BlockSpec((bblk, p1sz + 1, k1), lambda i: (i, 0, 0)),  # xpe
            pl.BlockSpec((bblk, p1sz, k1), lambda i: (i, 0, 0)),      # xpo
            pl.BlockSpec((bblk, 2), lambda i: (i, 0)),                # target
            const_spec(w1), const_spec(s1t),
            const_spec(w2), const_spec(s2t), const_spec(sdn),
            const_spec(w1f), const_spec(w1t), const_spec(b1),
            const_spec(w2fc), const_spec(b2),
        ],
        out_specs=pl.BlockSpec((bblk, na), lambda i: (i, 0)),
        compiler_params=pltpu.CompilerParams(
            dimension_semantics=("parallel",)),
    )(xpe, xpo, tgt, w1, s1t, w2, s2t, sdn, w1f, w1t, b1, w2fc, b2)

    return out[:n]


# ----------------------------- pure-JAX reference ---------------------------

def reference_forward(params, sensor_nchw, target, eps=1e-5):
    def conv(x, w, b):
        y = lax.conv_general_dilated(x, w, (1, 1), ((1, 1), (1, 1)),
                                     dimension_numbers=('NCHW', 'OIHW', 'NCHW'))
        return y + b[None, :, None, None]

    def bn(x, g, be, m, v):
        return (g[None, :, None, None] * (x - m[None, :, None, None])
                / jnp.sqrt(v + eps)[None, :, None, None]
                + be[None, :, None, None])

    def pool(x):
        return lax.reduce_window(x, -jnp.inf, lax.max,
                                 (1, 1, 2, 2), (1, 1, 2, 2), 'VALID')

    h = pool(jax.nn.relu(bn(conv(sensor_nchw, params['conv1_w'], params['conv1_b']),
                            params['bn1_gamma'], params['bn1_beta'],
                            params['bn1_mean'], params['bn1_var'])))
    h = pool(jax.nn.relu(bn(conv(h, params['conv2_w'], params['conv2_b']),
                            params['bn2_gamma'], params['bn2_beta'],
                            params['bn2_mean'], params['bn2_var'])))
    flat = h.reshape(h.shape[0], -1)
    z = jnp.concatenate([flat, target], axis=1)
    hfc = jax.nn.relu(z @ params['fc1_w'].T + params['fc1_b'])
    return hfc @ params['fc2_w'].T + params['fc2_b']


# -------------------------------- parameters --------------------------------

def init_params(key, input_width, num_hidden, num_action):
    width = int(input_width / 4) + 1
    fc1_in = width * width * 32 + 2
    ks = jax.random.split(key, 16)

    def rnd(k, shape, s=0.1):
        return (s * jax.random.normal(k, shape)).astype(jnp.float32)

    return dict(
        conv1_w=rnd(ks[0], (16, 1, 2, 2)), conv1_b=rnd(ks[1], (16,)),
        bn1_gamma=(1.0 + rnd(ks[2], (16,))), bn1_beta=rnd(ks[3], (16,)),
        bn1_mean=rnd(ks[4], (16,)), bn1_var=jnp.abs(1.0 + rnd(ks[5], (16,))),
        conv2_w=rnd(ks[6], (32, 16, 2, 2)), conv2_b=rnd(ks[7], (32,)),
        bn2_gamma=(1.0 + rnd(ks[8], (32,))), bn2_beta=rnd(ks[9], (32,)),
        bn2_mean=rnd(ks[10], (32,)), bn2_var=jnp.abs(1.0 + rnd(ks[11], (32,))),
        fc1_w=rnd(ks[12], (num_hidden, fc1_in)), fc1_b=rnd(ks[13], (num_hidden,)),
        fc2_w=rnd(ks[14], (num_action, num_hidden)), fc2_b=rnd(ks[15], (num_action,)),
    )


# ----------------------------------- main ------------------------------------

if __name__ == "__main__":
    INPUT_WIDTH = 15   # odd width so int(W/4)+1 matches the conv/pool output size
    NUM_HIDDEN = 32
    NUM_ACTION = 4
    BATCH = 2

    key = jax.random.PRNGKey(0)
    k_sensor, k_target, k_params = jax.random.split(key, 3)

    sensor = jax.random.normal(
        k_sensor, (BATCH, 1, INPUT_WIDTH, INPUT_WIDTH)).astype(jnp.float32)
    target = jax.random.normal(k_target, (BATCH, 2)).astype(jnp.float32)
    params = init_params(k_params, INPUT_WIDTH, NUM_HIDDEN, NUM_ACTION)

    out = jax.block_until_ready(
        jax.jit(mul_chan_convnet_pallas)(params, sensor, target))
    ref = jax.block_until_ready(reference_forward(params, sensor, target))

    assert out.shape == (BATCH, NUM_ACTION), out.shape
    err = jnp.max(jnp.abs(out - ref))
    assert jnp.allclose(out, ref, atol=2e-3, rtol=2e-3), f"mismatch: {err}"

    print("KERNEL_OK")
</pallas_src>

<mosaic_0001>
module attributes {stable_mosaic.version = 11 : i64} {
  func.func @_fused_forward_kernel(%arg0: i32, %arg1: memref<8x9x24xf32, #tpu.memory_space<vmem>>, %arg2: memref<8x8x24xf32, #tpu.memory_space<vmem>>, %arg3: memref<8x2xf32, #tpu.memory_space<vmem>>, %arg4: memref<2x24x256xf32, #tpu.memory_space<vmem>>, %arg5: memref<1x256xf32, #tpu.memory_space<vmem>>, %arg6: memref<2x240x256xf32, #tpu.memory_space<vmem>>, %arg7: memref<1x256xf32, #tpu.memory_space<vmem>>, %arg8: memref<64x64xf32, #tpu.memory_space<vmem>>, %arg9: memref<4x224x32xf32, #tpu.memory_space<vmem>>, %arg10: memref<2x32xf32, #tpu.memory_space<vmem>>, %arg11: memref<1x32xf32, #tpu.memory_space<vmem>>, %arg12: memref<32x4xf32, #tpu.memory_space<vmem>>, %arg13: memref<1x4xf32, #tpu.memory_space<vmem>>, %arg14: memref<8x4xf32, #tpu.memory_space<vmem>>) attributes {dimension_semantics = [#tpu.dimension_semantics<parallel>], iteration_bounds = array<i64: 1>, scalar_prefetch = 0 : i64, scratch_operands = 0 : i64, tpu.core_type = #tpu.core_type<tc>, window_params = [{transform_indices = @transform_0, window_bounds = array<i64: 8, 9, 24>}, {transform_indices = @transform_1, window_bounds = array<i64: 8, 8, 24>}, {transform_indices = @transform_2, window_bounds = array<i64: 8, 2>}, {pipeline_mode = #tpu.pipeline_mode<synchronous>, transform_indices = @transform_3, window_bounds = array<i64: 2, 24, 256>}, {pipeline_mode = #tpu.pipeline_mode<synchronous>, transform_indices = @transform_4, window_bounds = array<i64: 1, 256>}, {pipeline_mode = #tpu.pipeline_mode<synchronous>, transform_indices = @transform_5, window_bounds = array<i64: 2, 240, 256>}, {pipeline_mode = #tpu.pipeline_mode<synchronous>, transform_indices = @transform_6, window_bounds = array<i64: 1, 256>}, {pipeline_mode = #tpu.pipeline_mode<synchronous>, transform_indices = @transform_7, window_bounds = array<i64: 64, 64>}, {pipeline_mode = #tpu.pipeline_mode<synchronous>, transform_indices = @transform_8, window_bounds = array<i64: 4, 224, 32>}, {pipeline_mode = #tpu.pipeline_mode<synchronous>, transform_indices = @transform_9, window_bounds = array<i64: 2, 32>}, {pipeline_mode = #tpu.pipeline_mode<synchronous>, transform_indices = @transform_10, window_bounds = array<i64: 1, 32>}, {pipeline_mode = #tpu.pipeline_mode<synchronous>, transform_indices = @transform_11, window_bounds = array<i64: 32, 4>}, {pipeline_mode = #tpu.pipeline_mode<synchronous>, transform_indices = @transform_12, window_bounds = array<i64: 1, 4>}, {transform_indices = @transform_13, window_bounds = array<i64: 8, 4>}]} {
    %c0 = arith.constant 0 : index
    %c0_0 = arith.constant 0 : index
    %c0_1 = arith.constant 0 : index
    %0 = vector.load %arg1[%c0, %c0_0, %c0_1] : memref<8x9x24xf32, #tpu.memory_space<vmem>>, vector<8x8x24xf32>
    %1 = vector.shape_cast %0 : vector<8x8x24xf32> to vector<64x24xf32>
    %c0_2 = arith.constant 0 : index
    %c0_3 = arith.constant 0 : index
    %c0_4 = arith.constant 0 : index
    %2 = vector.load %arg2[%c0_2, %c0_3, %c0_4] : memref<8x8x24xf32, #tpu.memory_space<vmem>>, vector<8x8x24xf32>
    %3 = vector.shape_cast %2 : vector<8x8x24xf32> to vector<64x24xf32>
    %c0_5 = arith.constant 0 : index
    %c1 = arith.constant 1 : index
    %c0_6 = arith.constant 0 : index
    %4 = vector.load %arg1[%c0_5, %c1, %c0_6] : memref<8x9x24xf32, #tpu.memory_space<vmem>>, vector<8x8x24xf32>
    %5 = vector.shape_cast %4 : vector<8x8x24xf32> to vector<64x24xf32>
    %c0_7 = arith.constant 0 : index
    %c0_8 = arith.constant 0 : index
    %c0_9 = arith.constant 0 : index
    %6 = vector.load %arg4[%c0_7, %c0_8, %c0_9] : memref<2x24x256xf32, #tpu.memory_space<vmem>>, vector<1x24x256xf32>
    %7 = vector.shape_cast %6 : vector<1x24x256xf32> to vector<24x256xf32>
    %c1_10 = arith.constant 1 : index
    %c0_11 = arith.constant 0 : index
    %c0_12 = arith.constant 0 : index
    %8 = vector.load %arg4[%c1_10, %c0_11, %c0_12] : memref<2x24x256xf32, #tpu.memory_space<vmem>>, vector<1x24x256xf32>
    %9 = vector.shape_cast %8 : vector<1x24x256xf32> to vector<24x256xf32>
    %cst = arith.constant dense<0.000000e+00> : vector<64x256xf32>
    %10 = tpu.matmul %1, %7, %cst {dimension_numbers = #tpu.dot_dimension_numbers<[1], [0], [0], [1], [0, 0, 1, 1], [], []>} : vector<64x24xf32>, vector<24x256xf32>, vector<64x256xf32> -> vector<64x256xf32>
    %cst_13 = arith.constant dense<0.000000e+00> : vector<64x256xf32>
    %11 = tpu.matmul %3, %9, %cst_13 {dimension_numbers = #tpu.dot_dimension_numbers<[1], [0], [0], [1], [0, 0, 1, 1], [], []>} : vector<64x24xf32>, vector<24x256xf32>, vector<64x256xf32> -> vector<64x256xf32>
    %12 = arith.addf %10, %11 : vector<64x256xf32>
    %cst_14 = arith.constant dense<0.000000e+00> : vector<64x256xf32>
    %13 = tpu.matmul %3, %7, %cst_14 {dimension_numbers = #tpu.dot_dimension_numbers<[1], [0], [0], [1], [0, 0, 1, 1], [], []>} : vector<64x24xf32>, vector<24x256xf32>, vector<64x256xf32> -> vector<64x256xf32>
    %cst_15 = arith.constant dense<0.000000e+00> : vector<64x256xf32>
    %14 = tpu.matmul %5, %9, %cst_15 {dimension_numbers = #tpu.dot_dimension_numbers<[1], [0], [0], [1], [0, 0, 1, 1], [], []>} : vector<64x24xf32>, vector<24x256xf32>, vector<64x256xf32> -> vector<64x256xf32>
    %15 = arith.addf %13, %14 : vector<64x256xf32>
    %16 = arith.maximumf %12, %15 : vector<64x256xf32>
    %c0_16 = arith.constant 0 : index
    %c0_17 = arith.constant 0 : index
    %17 = vector.load %arg5[%c0_16, %c0_17] : memref<1x256xf32, #tpu.memory_space<vmem>>, vector<1x256xf32>
    %18 = vector.broadcast %17 : vector<1x256xf32> to vector<64x256xf32>
    %19 = arith.addf %16, %18 : vector<64x256xf32>
    %cst_18 = arith.constant 0.000000e+00 : f32
    %20 = vector.broadcast %cst_18 : f32 to vector<64x256xf32>
    %21 = arith.maximumf %19, %20 : vector<64x256xf32>
    %22 = vector.extract_strided_slice %21 {offsets = [0, 0], sizes = [64, 240], strides = [1, 1]} : vector<64x256xf32> to vector<64x240xf32>
    %23 = vector.extract_strided_slice %21 {offsets = [0, 16], sizes = [64, 240], strides = [1, 1]} : vector<64x256xf32> to vector<64x240xf32>
    %24 = arith.maximumf %22, %23 : vector<64x240xf32>
    %c0_19 = arith.constant 0 : index
    %c0_20 = arith.constant 0 : index
    %25 = vector.load %arg8[%c0_19, %c0_20] : memref<64x64xf32, #tpu.memory_space<vmem>>, vector<64x64xf32>
    %cst_21 = arith.constant dense<0.000000e+00> : vector<64x240xf32>
    %26 = tpu.matmul %25, %24, %cst_21 {dimension_numbers = #tpu.dot_dimension_numbers<[1], [0], [0], [1], [0, 0, 1, 1], [], []>} : vector<64x64xf32>, vector<64x240xf32>, vector<64x240xf32> -> vector<64x240xf32>
    %c0_22 = arith.constant 0 : index
    %c0_23 = arith.constant 0 : index
    %c0_24 = arith.constant 0 : index
    %27 = vector.load %arg6[%c0_22, %c0_23, %c0_24] : memref<2x240x256xf32, #tpu.memory_space<vmem>>, vector<1x240x256xf32>
    %28 = vector.shape_cast %27 : vector<1x240x256xf32> to vector<240x256xf32>
    %cst_25 = arith.constant dense<0.000000e+00> : vector<64x256xf32>
    %29 = tpu.matmul %26, %28, %cst_25 {dimension_numbers = #tpu.dot_dimension_numbers<[1], [0], [0], [1], [0, 0, 1, 1], [], []>} : vector<64x240xf32>, vector<240x256xf32>, vector<64x256xf32> -> vector<64x256xf32>
    %c1_26 = arith.constant 1 : index
    %c0_27 = arith.constant 0 : index
    %c0_28 = arith.constant 0 : index
    %30 = vector.load %arg6[%c1_26, %c0_27, %c0_28] : memref<2x240x256xf32, #tpu.memory_space<vmem>>, vector<1x240x256xf32>
    %31 = vector.shape_cast %30 : vector<1x240x256xf32> to vector<240x256xf32>
    %cst_29 = arith.constant dense<0.000000e+00> : vector<64x256xf32>
    %32 = tpu.matmul %24, %31, %cst_29 {dimension_numbers = #tpu.dot_dimension_numbers<[1], [0], [0], [1], [0, 0, 1, 1], [], []>} : vector<64x240xf32>, vector<240x256xf32>, vector<64x256xf32> -> vector<64x256xf32>
    %33 = arith.addf %29, %32 : vector<64x256xf32>
    %c0_30 = arith.constant 0 : index
    %c0_31 = arith.constant 0 : index
    %34 = vector.load %arg7[%c0_30, %c0_31] : memref<1x256xf32, #tpu.memory_space<vmem>>, vector<1x256xf32>
    %35 = vector.broadcast %34 : vector<1x256xf32> to vector<64x256xf32>
    %36 = arith.addf %33, %35 : vector<64x256xf32>
    %cst_32 = arith.constant 0.000000e+00 : f32
    %37 = vector.broadcast %cst_32 : f32 to vector<64x256xf32>
    %38 = arith.maximumf %36, %37 : vector<64x256xf32>
    %39 = vector.extract_strided_slice %38 {offsets = [0, 0], sizes = [64, 224], strides = [1, 1]} : vector<64x256xf32> to vector<64x224xf32>
    %40 = vector.extract_strided_slice %38 {offsets = [0, 32], sizes = [64, 224], strides = [1, 1]} : vector<64x256xf32> to vector<64x224xf32>
    %41 = arith.maximumf %39, %40 : vector<64x224xf32>
    %42 = vector.shape_cast %41 : vector<64x224xf32> to vector<8x8x224xf32>
    %c0_33 = arith.constant 0 : index
    %c0_34 = arith.constant 0 : index
    %43 = vector.load %arg3[%c0_33, %c0_34] : memref<8x2xf32, #tpu.memory_space<vmem>>, vector<8x2xf32>
    %c0_35 = arith.constant 0 : index
    %c0_36 = arith.constant 0 : index
    %44 = vector.load %arg10[%c0_35, %c0_36] : memref<2x32xf32, #tpu.memory_space<vmem>>, vector<2x32xf32>
    %cst_37 = arith.constant dense<0.000000e+00> : vector<8x32xf32>
    %45 = tpu.matmul %43, %44, %cst_37 {dimension_numbers = #tpu.dot_dimension_numbers<[1], [0], [0], [1], [0, 0, 1, 1], [], []>} : vector<8x2xf32>, vector<2x32xf32>, vector<8x32xf32> -> vector<8x32xf32>
    %c0_38 = arith.constant 0 : index
    %c0_39 = arith.constant 0 : index
    %46 = vector.load %arg11[%c0_38, %c0_39] : memref<1x32xf32, #tpu.memory_space<vmem>>, vector<1x32xf32>
    %47 = vector.broadcast %46 : vector<1x32xf32> to vector<8x32xf32>
    %48 = arith.addf %45, %47 : vector<8x32xf32>
    %49 = vector.extract_strided_slice %42 {offsets = [0, 0, 0], sizes = [8, 1, 224], strides = [1, 1, 1]} : vector<8x8x224xf32> to vector<8x1x224xf32>
    %50 = vector.shape_cast %49 : vector<8x1x224xf32> to vector<8x224xf32>
    %51 = vector.extract_strided_slice %42 {offsets = [0, 1, 0], sizes = [8, 1, 224], strides = [1, 1, 1]} : vector<8x8x224xf32> to vector<8x1x224xf32>
    %52 = vector.shape_cast %51 : vector<8x1x224xf32> to vector<8x224xf32>
    %53 = arith.maximumf %50, %52 : vector<8x224xf32>
    %c0_40 = arith.constant 0 : index
    %c0_41 = arith.constant 0 : index
    %c0_42 = arith.constant 0 : index
    %54 = vector.load %arg9[%c0_40, %c0_41, %c0_42] : memref<4x224x32xf32, #tpu.memory_space<vmem>>, vector<1x224x32xf32>
    %55 = vector.shape_cast %54 : vector<1x224x32xf32> to vector<224x32xf32>
    %cst_43 = arith.constant dense<0.000000e+00> : vector<8x32xf32>
    %56 = tpu.matmul %53, %55, %cst_43 {dimension_numbers = #tpu.dot_dimension_numbers<[1], [0], [0], [1], [0, 0, 1, 1], [], []>} : vector<8x224xf32>, vector<224x32xf32>, vector<8x32xf32> -> vector<8x32xf32>
    %57 = arith.addf %48, %56 : vector<8x32xf32>
    %58 = vector.extract_strided_slice %42 {offsets = [0, 2, 0], sizes = [8, 1, 224], strides = [1, 1, 1]} : vector<8x8x224xf32> to vector<8x1x224xf32>
    %59 = vector.shape_cast %58 : vector<8x1x224xf32> to vector<8x224xf32>
    %60 = vector.extract_strided_slice %42 {offsets = [0, 3, 0], sizes = [8, 1, 224], strides = [1, 1, 1]} : vector<8x8x224xf32> to vector<8x1x224xf32>
    %61 = vector.shape_cast %60 : vector<8x1x224xf32> to vector<8x224xf32>
    %62 = arith.maximumf %59, %61 : vector<8x224xf32>
    %c1_44 = arith.constant 1 : index
    %c0_45 = arith.constant 0 : index
    %c0_46 = arith.constant 0 : index
    %63 = vector.load %arg9[%c1_44, %c0_45, %c0_46] : memref<4x224x32xf32, #tpu.memory_space<vmem>>, vector<1x224x32xf32>
    %64 = vector.shape_cast %63 : vector<1x224x32xf32> to vector<224x32xf32>
    %cst_47 = arith.constant dense<0.000000e+00> : vector<8x32xf32>
    %65 = tpu.matmul %62, %64, %cst_47 {dimension_numbers = #tpu.dot_dimension_numbers<[1], [0], [0], [1], [0, 0, 1, 1], [], []>} : vector<8x224xf32>, vector<224x32xf32>, vector<8x32xf32> -> vector<8x32xf32>
    %66 = arith.addf %57, %65 : vector<8x32xf32>
    %67 = vector.extract_strided_slice %42 {offsets = [0, 4, 0], sizes = [8, 1, 224], strides = [1, 1, 1]} : vector<8x8x224xf32> to vector<8x1x224xf32>
    %68 = vector.shape_cast %67 : vector<8x1x224xf32> to vector<8x224xf32>
    %69 = vector.extract_strided_slice %42 {offsets = [0, 5, 0], sizes = [8, 1, 224], strides = [1, 1, 1]} : vector<8x8x224xf32> to vector<8x1x224xf32>
    %70 = vector.shape_cast %69 : vector<8x1x224xf32> to vector<8x224xf32>
    %71 = arith.maximumf %68, %70 : vector<8x224xf32>
    %c2 = arith.constant 2 : index
    %c0_48 = arith.constant 0 : index
    %c0_49 = arith.constant 0 : index
    %72 = vector.load %arg9[%c2, %c0_48, %c0_49] : memref<4x224x32xf32, #tpu.memory_space<vmem>>, vector<1x224x32xf32>
    %73 = vector.shape_cast %72 : vector<1x224x32xf32> to vector<224x32xf32>
    %cst_50 = arith.constant dense<0.000000e+00> : vector<8x32xf32>
    %74 = tpu.matmul %71, %73, %cst_50 {dimension_numbers = #tpu.dot_dimension_numbers<[1], [0], [0], [1], [0, 0, 1, 1], [], []>} : vector<8x224xf32>, vector<224x32xf32>, vector<8x32xf32> -> vector<8x32xf32>
    %75 = arith.addf %66, %74 : vector<8x32xf32>
    %76 = vector.extract_strided_slice %42 {offsets = [0, 6, 0], sizes = [8, 1, 224], strides = [1, 1, 1]} : vector<8x8x224xf32> to vector<8x1x224xf32>
    %77 = vector.shape_cast %76 : vector<8x1x224xf32> to vector<8x224xf32>
    %78 = vector.extract_strided_slice %42 {offsets = [0, 7, 0], sizes = [8, 1, 224], strides = [1, 1, 1]} : vector<8x8x224xf32> to vector<8x1x224xf32>
    %79 = vector.shape_cast %78 : vector<8x1x224xf32> to vector<8x224xf32>
    %80 = arith.maximumf %77, %79 : vector<8x224xf32>
    %c3 = arith.constant 3 : index
    %c0_51 = arith.constant 0 : index
    %c0_52 = arith.constant 0 : index
    %81 = vector.load %arg9[%c3, %c0_51, %c0_52] : memref<4x224x32xf32, #tpu.memory_space<vmem>>, vector<1x224x32xf32>
    %82 = vector.shape_cast %81 : vector<1x224x32xf32> to vector<224x32xf32>
    %cst_53 = arith.constant dense<0.000000e+00> : vector<8x32xf32>
    %83 = tpu.matmul %80, %82, %cst_53 {dimension_numbers = #tpu.dot_dimension_numbers<[1], [0], [0], [1], [0, 0, 1, 1], [], []>} : vector<8x224xf32>, vector<224x32xf32>, vector<8x32xf32> -> vector<8x32xf32>
    %84 = arith.addf %75, %83 : vector<8x32xf32>
    %cst_54 = arith.constant 0.000000e+00 : f32
    %85 = vector.broadcast %cst_54 : f32 to vector<8x32xf32>
    %86 = arith.maximumf %84, %85 : vector<8x32xf32>
    %c0_55 = arith.constant 0 : index
    %c0_56 = arith.constant 0 : index
    %87 = vector.load %arg12[%c0_55, %c0_56] : memref<32x4xf32, #tpu.memory_space<vmem>>, vector<32x4xf32>
    %cst_57 = arith.constant dense<0.000000e+00> : vector<8x4xf32>
    %88 = tpu.matmul %86, %87, %cst_57 {dimension_numbers = #tpu.dot_dimension_numbers<[1], [0], [0], [1], [0, 0, 1, 1], [], []>} : vector<8x32xf32>, vector<32x4xf32>, vector<8x4xf32> -> vector<8x4xf32>
    %c0_58 = arith.constant 0 : index
    %c0_59 = arith.constant 0 : index
    %89 = vector.load %arg13[%c0_58, %c0_59] : memref<1x4xf32, #tpu.memory_space<vmem>>, vector<1x4xf32>
    %90 = vector.broadcast %89 : vector<1x4xf32> to vector<8x4xf32>
    %91 = arith.addf %88, %90 : vector<8x4xf32>
    %c0_60 = arith.constant 0 : index
    %c0_61 = arith.constant 0 : index
    %92 = vector.load %arg14[%c0_60, %c0_61] : memref<8x4xf32, #tpu.memory_space<vmem>>, vector<8x4xf32>
    tpu.vector_store %arg14[%c0_60, %c0_61], %91 {strides = array<i32>} : memref<8x4xf32, #tpu.memory_space<vmem>>, vector<8x4xf32>,
    return
  }
  func.func @transform_0(%arg0: i32) -> (i32, i32, i32) {
    %c0_i32 = arith.constant 0 : i32
    %c0_i32_0 = arith.constant 0 : i32
    %c0_i32_1 = arith.constant 0 : i32
    return %arg0, %c0_i32, %c0_i32_0 : i32, i32, i32
  }
  func.func @transform_1(%arg0: i32) -> (i32, i32, i32) {
    %c0_i32 = arith.constant 0 : i32
    %c0_i32_0 = arith.constant 0 : i32
    %c0_i32_1 = arith.constant 0 : i32
    return %arg0, %c0_i32, %c0_i32_0 : i32, i32, i32
  }
  func.func @transform_2(%arg0: i32) -> (i32, i32) {
    %c0_i32 = arith.constant 0 : i32
    %c0_i32_0 = arith.constant 0 : i32
    return %arg0, %c0_i32 : i32, i32
  }
  func.func @transform_3(%arg0: i32) -> (i32, i32, i32) {
    %c0_i32 = arith.constant 0 : i32
    %c0_i32_0 = arith.constant 0 : i32
    %c0_i32_1 = arith.constant 0 : i32
    %c0_i32_2 = arith.constant 0 : i32
    return %c0_i32, %c0_i32_0, %c0_i32_1 : i32, i32, i32
  }
  func.func @transform_4(%arg0: i32) -> (i32, i32) {
    %c0_i32 = arith.constant 0 : i32
    %c0_i32_0 = arith.constant 0 : i32
    %c0_i32_1 = arith.constant 0 : i32
    return %c0_i32, %c0_i32_0 : i32, i32
  }
  func.func @transform_5(%arg0: i32) -> (i32, i32, i32) {
    %c0_i32 = arith.constant 0 : i32
    %c0_i32_0 = arith.constant 0 : i32
    %c0_i32_1 = arith.constant 0 : i32
    %c0_i32_2 = arith.constant 0 : i32
    return %c0_i32, %c0_i32_0, %c0_i32_1 : i32, i32, i32
  }
  func.func @transform_6(%arg0: i32) -> (i32, i32) {
    %c0_i32 = arith.constant 0 : i32
    %c0_i32_0 = arith.constant 0 : i32
    %c0_i32_1 = arith.constant 0 : i32
    return %c0_i32, %c0_i32_0 : i32, i32
  }
  func.func @transform_7(%arg0: i32) -> (i32, i32) {
    %c0_i32 = arith.constant 0 : i32
    %c0_i32_0 = arith.constant 0 : i32
    %c0_i32_1 = arith.constant 0 : i32
    return %c0_i32, %c0_i32_0 : i32, i32
  }
  func.func @transform_8(%arg0: i32) -> (i32, i32, i32) {
    %c0_i32 = arith.constant 0 : i32
    %c0_i32_0 = arith.constant 0 : i32
    %c0_i32_1 = arith.constant 0 : i32
    %c0_i32_2 = arith.constant 0 : i32
    return %c0_i32, %c0_i32_0, %c0_i32_1 : i32, i32, i32
  }
  func.func @transform_9(%arg0: i32) -> (i32, i32) {
    %c0_i32 = arith.constant 0 : i32
    %c0_i32_0 = arith.constant 0 : i32
    %c0_i32_1 = arith.constant 0 : i32
    return %c0_i32, %c0_i32_0 : i32, i32
  }
  func.func @transform_10(%arg0: i32) -> (i32, i32) {
    %c0_i32 = arith.constant 0 : i32
    %c0_i32_0 = arith.constant 0 : i32
    %c0_i32_1 = arith.constant 0 : i32
    return %c0_i32, %c0_i32_0 : i32, i32
  }
  func.func @transform_11(%arg0: i32) -> (i32, i32) {
    %c0_i32 = arith.constant 0 : i32
    %c0_i32_0 = arith.constant 0 : i32
    %c0_i32_1 = arith.constant 0 : i32
    return %c0_i32, %c0_i32_0 : i32, i32
  }
  func.func @transform_12(%arg0: i32) -> (i32, i32) {
    %c0_i32 = arith.constant 0 : i32
    %c0_i32_0 = arith.constant 0 : i32
    %c0_i32_1 = arith.constant 0 : i32
    return %c0_i32, %c0_i32_0 : i32, i32
  }
  func.func @transform_13(%arg0: i32) -> (i32, i32) {
    %c0_i32 = arith.constant 0 : i32
    %c0_i32_0 = arith.constant 0 : i32
    return %arg0, %c0_i32 : i32, i32
  }
}

</mosaic_0001>

<llo_original>
// kernel: tile.13
$region0: #{tile.13}
  #allocation0 [shape = 's32[1]{0}', space=sflag, size = 0x4, scoped, tag = 'scoped memory for tile.13']
  %s0 = inlined_call_operand.vmem [shape: f32[16], index: 0, kind: input, shape index: {}]
  %s1 = inlined_call_operand.vmem [shape: f32[16,16], index: 1, kind: output, shape index: {}]
  // Predicated region
  $region2: #{tile.13} parent=0 // pred_check
    _
  $region3: #{tile.13} parent=0 // pred_check_branch
    %3 = sbr.rel (0) target = $region5
  $region4: #{tile.13} parent=0 // pred_region
    _
  $region5: #{tile.13} parent=0 // pred_fallthru
    _
  %v4 = vld [vmem:[%s0] ss:$0 sm:$0xff]
  %5 = vst [vmem:[%s1] sm:$0xff] %v4
  %s6 = scalar_lea.vmem %s1, 8
  %7 = vst [vmem:[%s6] sm:$0xff] %v4

// kernel: tile.14
$region0: #{tile.14}
  %s0 = inlined_call_operand.vmem [shape: f32[16,16], index: 0, kind: input, shape index: {}]
  %s1 = inlined_call_operand.vmem [shape: f32[1,256], index: 1, kind: output, shape index: {}]
  $region1: #{tile.14} parent=0
    #allocation0 [shape = 'u8[8192]{0}', space=vmem, size = 0x2000, scoped, tag = 'scoped mem for output reshape']
    %s2 = smov 3
    %v3 = vld [vmem:[%s0] ss:$8 sm:%s2]
    %vm4 = vcmask 130048
    %5 = vst.msk [vmem:[#allocation0] ss:$8 sm:$0x3] %vm4, %v3
    %s6 = scalar_lea.vmem %s0, 7
    %s7 = smov 3
    %v8 = vld [vmem:[%s6] ss:$8 sm:%s7]
    %9 = vrot.lane.b32.xlu0 %v8, 112
    %v10 = vpop.permute.xlu0 %9
    %vm11 = vcmask 1048448
    %12 = vst.msk [vmem:[#allocation0] ss:$8 sm:$0x3] %vm11, %v10
    %s13 = scalar_lea.vmem %s0, 6
    %s14 = smov 3
    %v15 = vld [vmem:[%s13] ss:$8 sm:%s14]
    %16 = vrot.lane.b32.xlu0 %v15, 96
    %v17 = vpop.permute.xlu0 %16
    %vm18 = vcmask 917248
    %19 = vst.msk [vmem:[#allocation0] ss:$8 sm:$0x3] %vm18, %v17
    %s20 = scalar_lea.vmem %s0, 5
    %s21 = smov 3
    %v22 = vld [vmem:[%s20] ss:$8 sm:%s21]
    %23 = vrot.lane.b32.xlu0 %v22, 80
    %v24 = vpop.permute.xlu0 %23
    %vm25 = vcmask 786048
    %26 = vst.msk [vmem:[#allocation0] ss:$8 sm:$0x3] %vm25, %v24
    %s27 = scalar_lea.vmem %s0, 4
    %s28 = smov 3
    %v29 = vld [vmem:[%s27] ss:$8 sm:%s28]
    %30 = vrot.lane.b32.xlu0 %v29, 64
    %v31 = vpop.permute.xlu0 %30
    %vm32 = vcmask 654848
    %33 = vst.msk [vmem:[#allocation0] ss:$8 sm:$0x3] %vm32, %v31
    %s34 = scalar_lea.vmem %s0, 3
    %s35 = smov 3
    %v36 = vld [vmem:[%s34] ss:$8 sm:%s35]
    %37 = vrot.lane.b32.xlu0 %v36, 48
    %v38 = vpop.permute.xlu0 %37
    %vm39 = vcmask 523648
    %40 = vst.msk [vmem:[#allocation0] ss:$8 sm:$0x3] %vm39, %v38
    %s41 = scalar_lea.vmem %s0, 2
    %s42 = smov 3
    %v43 = vld [vmem:[%s41] ss:$8 sm:%s42]
    %44 = vrot.lane.b32.xlu0 %v43, 32
    %v45 = vpop.permute.xlu0 %44
    %vm46 = vcmask 392448
    %47 = vst.msk [vmem:[#allocation0] ss:$8 sm:$0x3] %vm46, %v45
    %s48 = scalar_lea.vmem %s0, 1
    %s49 = smov 3
    %v50 = vld [vmem:[%s48] ss:$8 sm:%s49]
    %51 = vrot.lane.b32.xlu0 %v50, 16
    %v52 = vpop.permute.xlu0 %51
    %vm53 = vcmask 261248
    %54 = vst.msk [vmem:[#allocation0] ss:$8 sm:$0x3] %vm53, %v52
    %s56 = ssub.s32 2, 1
    %v57 = vld [vmem:[#allocation0] sm:%s56]
    %s59 = ssub.s32 2, 1
    %60 = vst [vmem:[%s1] sm:%s59] %v57
    %s61 = scalar_lea.vmem [#allocation0], 8
    %v62 = vld [vmem:[%s61] sm:%s56]
    %s64 = ssub.s32 2, 1
    %s65 = scalar_lea.vmem %s1, 1
    %66 = vst [vmem:[%s65] sm:%s64] %v62

// kernel: tile.18
$region0: #{tile.18}
  #allocation0 [shape = 's32[1]{0}', space=sflag, size = 0x4, scoped, tag = 'scoped memory for tile.18']
  %s0 = inlined_call_operand.vmem [shape: f32[32], index: 0, kind: input, shape index: {}]
  %s1 = inlined_call_operand.vmem [shape: f32[8,32], index: 1, kind: output, shape index: {}]
  // Predicated region
  $region2: #{tile.18} parent=0 // pred_check
    _
  $region3: #{tile.18} parent=0 // pred_check_branch
    %3 = sbr.rel (0) target = $region5
  $region4: #{tile.18} parent=0 // pred_region
    _
  $region5: #{tile.18} parent=0 // pred_fallthru
    _
  %v4 = vld [vmem:[%s0] ss:$0 sm:$0xff]
  %5 = vst [vmem:[%s1] sm:$0xff] %v4

// kernel: tile.19
$region0: #{tile.19}
  %s0 = inlined_call_operand.vmem [shape: f32[8,32], index: 0, kind: input, shape index: {}]
  %s1 = inlined_call_operand.vmem [shape: f32[1,256], index: 1, kind: output, shape index: {}]
  $region1: #{tile.19} parent=0
    #allocation0 [shape = 'u8[8192]{0}', space=vmem, size = 0x2000, scoped, tag = 'scoped mem for output reshape']
    %s2 = smov 3
    %v3 = vld [vmem:[%s0] ss:$4 sm:%s2]
    %vm4 = vcmask 261120
    %5 = vst.msk [vmem:[#allocation0] ss:$8 sm:$0x3] %vm4, %v3
    %s6 = scalar_lea.vmem %s0, 3
    %s7 = smov 3
    %v8 = vld [vmem:[%s6] ss:$4 sm:%s7]
    %9 = vrot.lane.b32.xlu0 %v8, 96
    %v10 = vpop.permute.xlu0 %9
    %vm11 = vcmask 1048320
    %12 = vst.msk [vmem:[#allocation0] ss:$8 sm:$0x3] %vm11, %v10
    %s13 = scalar_lea.vmem %s0, 2
    %s14 = smov 3
    %v15 = vld [vmem:[%s13] ss:$4 sm:%s14]
    %16 = vrot.lane.b32.xlu0 %v15, 64
    %v17 = vpop.permute.xlu0 %16
    %vm18 = vcmask 785920
    %19 = vst.msk [vmem:[#allocation0] ss:$8 sm:$0x3] %vm18, %v17
    %s20 = scalar_lea.vmem %s0, 1
    %s21 = smov 3
    %v22 = vld [vmem:[%s20] ss:$4 sm:%s21]
    %23 = vrot.lane.b32.xlu0 %v22, 32
    %v24 = vpop.permute.xlu0 %23
    %vm25 = vcmask 523520
    %26 = vst.msk [vmem:[#allocation0] ss:$8 sm:$0x3] %vm25, %v24
    %s28 = ssub.s32 2, 1
    %v29 = vld [vmem:[#allocation0] sm:%s28]
    %s31 = ssub.s32 2, 1
    %32 = vst [vmem:[%s1] sm:%s31] %v29
    %s33 = scalar_lea.vmem [#allocation0], 8
    %v34 = vld [vmem:[%s33] sm:%s28]
    %s36 = ssub.s32 2, 1
    %s37 = scalar_lea.vmem %s1, 1
    %38 = vst [vmem:[%s37] sm:%s36] %v34

// kernel: mul_chan_convnet_pallas.1
$region0: #{mul_chan_convnet_pallas.1}
  #allocation0 [shape = 'u32[]', space=smem, size = 0x4, offset = 0x4, fixed_abs, tag = 'smem constant byte address 0x4 - core index']
  #allocation1 [shape = 'u32[72,128]{1,0:T(1,128)}', space=vmem, size = 0x9000, scoped, tag = 'internal scratch']
  %s0 = inlined_call_operand.vmem [shape: f32[8,9,24], index: 0, kind: input, shape index: {}]
  %s1 = inlined_call_operand.vmem [shape: f32[8,8,24], index: 1, kind: input, shape index: {}]
  %s2 = inlined_call_operand.vmem [shape: f32[8,2], index: 2, kind: input, shape index: {}]
  %s3 = inlined_call_operand.vmem [shape: f32[2,24,256], index: 3, kind: input, shape index: {}]
  %s4 = inlined_call_operand.vmem [shape: f32[1,256], index: 4, kind: input, shape index: {}]
  %s5 = inlined_call_operand.vmem [shape: f32[2,240,256], index: 5, kind: input, shape index: {}]
  %s6 = inlined_call_operand.vmem [shape: f32[1,256], index: 6, kind: input, shape index: {}]
  %s7 = inlined_call_operand.vmem [shape: f32[64,64], index: 7, kind: input, shape index: {}]
  %s8 = inlined_call_operand.vmem [shape: f32[4,224,32], index: 8, kind: input, shape index: {}]
  %s9 = inlined_call_operand.vmem [shape: f32[2,32], index: 9, kind: input, shape index: {}]
  %s10 = inlined_call_operand.vmem [shape: f32[1,32], index: 10, kind: input, shape index: {}]
  %s11 = inlined_call_operand.vmem [shape: f32[32,4], index: 11, kind: input, shape index: {}]
  %s12 = inlined_call_operand.vmem [shape: f32[1,4], index: 12, kind: input, shape index: {}]
  %s13 = inlined_call_operand.vmem [shape: f32[8,4], index: 13, kind: output, shape index: {}]
  %s14 = sld [smem:[#allocation0]]
  $region62: #{mul_chan_convnet_pallas.1} parent=0
    _
  %s16 = ssub.s32 1, %s14
  %s17 = scalar_select 0, %s16, %s14
  // Predicated region
  $region2: #{mul_chan_convnet_pallas.1} parent=0 // pred_check
    _
  $region3: #{mul_chan_convnet_pallas.1} parent=0 // pred_check_branch
    %19 = sbr.rel (0) target = $region5
  $region4: #{mul_chan_convnet_pallas.1} parent=0 // pred_region
    _
  $region5: #{mul_chan_convnet_pallas.1} parent=0 // pred_fallthru
    _
  // Predicated region
  $region6: #{mul_chan_convnet_pallas.1} parent=0 // pred_check
    _
  $region7: #{mul_chan_convnet_pallas.1} parent=0 // pred_check_branch
    %21 = sbr.rel (0) target = $region9
  $region8: #{mul_chan_convnet_pallas.1} parent=0 // pred_region
    _
  $region9: #{mul_chan_convnet_pallas.1} parent=0 // pred_fallthru
    _
  // Predicated region
  $region10: #{mul_chan_convnet_pallas.1} parent=0 // pred_check
    _
  $region11: #{mul_chan_convnet_pallas.1} parent=0 // pred_check_branch
    %23 = sbr.rel (0) target = $region13
  $region12: #{mul_chan_convnet_pallas.1} parent=0 // pred_region
    _
  $region13: #{mul_chan_convnet_pallas.1} parent=0 // pred_fallthru
    _
  // Predicated region
  $region14: #{mul_chan_convnet_pallas.1} parent=0 // pred_check
    _
  $region15: #{mul_chan_convnet_pallas.1} parent=0 // pred_check_branch
    %25 = sbr.rel (0) target = $region17
  $region16: #{mul_chan_convnet_pallas.1} parent=0 // pred_region
    _
  $region17: #{mul_chan_convnet_pallas.1} parent=0 // pred_fallthru
    _
  // Predicated region
  $region18: #{mul_chan_convnet_pallas.1} parent=0 // pred_check
    _
  $region19: #{mul_chan_convnet_pallas.1} parent=0 // pred_check_branch
    %27 = sbr.rel (0) target = $region21
  $region20: #{mul_chan_convnet_pallas.1} parent=0 // pred_region
    _
  $region21: #{mul_chan_convnet_pallas.1} parent=0 // pred_fallthru
    _
  // Predicated region
  $region22: #{mul_chan_convnet_pallas.1} parent=0 // pred_check
    _
  $region23: #{mul_chan_convnet_pallas.1} parent=0 // pred_check_branch
    %29 = sbr.rel (0) target = $region25
  $region24: #{mul_chan_convnet_pallas.1} parent=0 // pred_region
    _
  $region25: #{mul_chan_convnet_pallas.1} parent=0 // pred_fallthru
    _
  // Predicated region
  $region26: #{mul_chan_convnet_pallas.1} parent=0 // pred_check
    _
  $region27: #{mul_chan_convnet_pallas.1} parent=0 // pred_check_branch
    %31 = sbr.rel (0) target = $region29
  $region28: #{mul_chan_convnet_pallas.1} parent=0 // pred_region
    _
  $region29: #{mul_chan_convnet_pallas.1} parent=0 // pred_fallthru
    _
  // Predicated region
  $region30: #{mul_chan_convnet_pallas.1} parent=0 // pred_check
    _
  $region31: #{mul_chan_convnet_pallas.1} parent=0 // pred_check_branch
    %33 = sbr.rel (0) target = $region33
  $region32: #{mul_chan_convnet_pallas.1} parent=0 // pred_region
    _
  $region33: #{mul_chan_convnet_pallas.1} parent=0 // pred_fallthru
    _
  // Predicated region
  $region34: #{mul_chan_convnet_pallas.1} parent=0 // pred_check
    _
  $region35: #{mul_chan_convnet_pallas.1} parent=0 // pred_check_branch
    %35 = sbr.rel (0) target = $region37
  $region36: #{mul_chan_convnet_pallas.1} parent=0 // pred_region
    _
  $region37: #{mul_chan_convnet_pallas.1} parent=0 // pred_fallthru
    _
  // Predicated region
  $region38: #{mul_chan_convnet_pallas.1} parent=0 // pred_check
    _
  $region39: #{mul_chan_convnet_pallas.1} parent=0 // pred_check_branch
    %37 = sbr.rel (0) target = $region41
  $region40: #{mul_chan_convnet_pallas.1} parent=0 // pred_region
    _
  $region41: #{mul_chan_convnet_pallas.1} parent=0 // pred_fallthru
    _
  // Predicated region
  $region42: #{mul_chan_convnet_pallas.1} parent=0 // pred_check
    _
  $region43: #{mul_chan_convnet_pallas.1} parent=0 // pred_check_branch
    %39 = sbr.rel (0) target = $region45
  $region44: #{mul_chan_convnet_pallas.1} parent=0 // pred_region
    _
  $region45: #{mul_chan_convnet_pallas.1} parent=0 // pred_fallthru
    _
  // Predicated region
  $region46: #{mul_chan_convnet_pallas.1} parent=0 // pred_check
    _
  $region47: #{mul_chan_convnet_pallas.1} parent=0 // pred_check_branch
    %41 = sbr.rel (0) target = $region49
  $region48: #{mul_chan_convnet_pallas.1} parent=0 // pred_region
    _
  $region49: #{mul_chan_convnet_pallas.1} parent=0 // pred_fallthru
    _
  // Predicated region
  $region50: #{mul_chan_convnet_pallas.1} parent=0 // pred_check
    _
  $region51: #{mul_chan_convnet_pallas.1} parent=0 // pred_check_branch
    %43 = sbr.rel (0) target = $region53
  $region52: #{mul_chan_convnet_pallas.1} parent=0 // pred_region
    _
  $region53: #{mul_chan_convnet_pallas.1} parent=0 // pred_fallthru
    _
  %v44 = vld [vmem:[%s0] sm:$0xff]
  %v45 = vld [vmem:[%s0 + $0x10] sm:$0xff]
  %v46 = vld [vmem:[%s0 + $0x20] sm:$0xff]
  %v47 = vld [vmem:[%s0 + $0x30] sm:$0xff]
  %v48 = vld [vmem:[%s0 + $0x40] sm:$0xff]
  %v49 = vld [vmem:[%s0 + $0x50] sm:$0xff]
  %v50 = vld [vmem:[%s0 + $0x60] sm:$0xff]
  %v51 = vld [vmem:[%s0 + $0x70] sm:$0xff]
  %v52 = vld [vmem:[%s1] sm:$0xff]
  %v53 = vld [vmem:[%s1 + $0x8] sm:$0xff]
  %v54 = vld [vmem:[%s1 + $0x10] sm:$0xff]
  %v55 = vld [vmem:[%s1 + $0x18] sm:$0xff]
  %v56 = vld [vmem:[%s1 + $0x20] sm:$0xff]
  %v57 = vld [vmem:[%s1 + $0x28] sm:$0xff]
  %v58 = vld [vmem:[%s1 + $0x30] sm:$0xff]
  %v59 = vld [vmem:[%s1 + $0x38] sm:$0xff]
  %v60 = vld [vmem:[%s0 + $0x1] sm:$0xff]
  %v61 = vld [vmem:[%s0 + $0x11] sm:$0xff]
  %v62 = vld [vmem:[%s0 + $0x21] sm:$0xff]
  %v63 = vld [vmem:[%s0 + $0x31] sm:$0xff]
  %v64 = vld [vmem:[%s0 + $0x41] sm:$0xff]
  %v65 = vld [vmem:[%s0 + $0x51] sm:$0xff]
  %v66 = vld [vmem:[%s0 + $0x61] sm:$0xff]
  %v67 = vld [vmem:[%s0 + $0x71] sm:$0xff]
  %v68 = vld [vmem:[%s3] sm:$0xff]
  %v69 = vld [vmem:[%s3 + $0x8] sm:$0xff]
  %v70 = vld [vmem:[%s3 + $0x10] sm:$0xff]
  %v71 = vld [vmem:[%s3 + $0x18] sm:$0xff]
  %v72 = vld [vmem:[%s3 + $0x20] sm:$0xff]
  %v73 = vld [vmem:[%s3 + $0x28] sm:$0xff]
  %s74 = scalar_lea.vmem %s3, 48
  %v75 = vld [vmem:[%s74] sm:$0xff]
  %v76 = vld [vmem:[%s74 + $0x8] sm:$0xff]
  %v77 = vld [vmem:[%s74 + $0x10] sm:$0xff]
  %v78 = vld [vmem:[%s74 + $0x18] sm:$0xff]
  %v79 = vld [vmem:[%s74 + $0x20] sm:$0xff]
  %v80 = vld [vmem:[%s74 + $0x28] sm:$0xff]
  %vm81 = vcmask 195584
  %v83 = vsel %vm81, %v52, 0
  %v86 = vsel %vm81, %v53, 0
  %v89 = vsel %vm81, %v54, 0
  %v92 = vsel %vm81, %v55, 0
  %v95 = vsel %vm81, %v56, 0
  %v98 = vsel %vm81, %v57, 0
  %v101 = vsel %vm81, %v58, 0
  %v104 = vsel %vm81, %v59, 0
  %106 = vmatpush.msra.mxu0 0.0
  %107 = vmatpush.msra.mxu0 0.0
  %108 = vmatpush.msra.mxu0 0.0
  %109 = vmatpush.msra.mxu0 0.0
  %110 = vmatpush.msra.mxu0 0.0
  %111 = vmatpush.msra.mxu0 0.0
  %112 = vmatpush.msra.mxu0 0.0
  %113 = vmatpush.msra.mxu0 0.0
  %114 = vmatpush.msra.mxu0 0.0
  %115 = vmatpush.msra.mxu0 0.0
  %116 = vmatpush.msra.mxu0 0.0
  %117 = vmatpush.msra.mxu0 0.0
  %118 = vmatpush.msra.mxu0 0.0
  %119 = vmatpush.msra.mxu0 %v79
  %120 = vmatpush.msra.mxu0 %v77
  %121 = vmatpush.msra.mxu0 %v75
  %122 = vmatmul.f32.gmra.mxu0 %v83
  %v123 = vpop.f32.mrf.mxu0
  %v124 = vadd.f32 0.0, %v123
  %125 = vmatmul.f32.gmra.mxu0 %v86
  %v126 = vpop.f32.mrf.mxu0
  %v127 = vadd.f32 0.0, %v126
  %128 = vmatmul.f32.gmra.mxu0 %v89
  %v129 = vpop.f32.mrf.mxu0
  %v130 = vadd.f32 0.0, %v129
  %131 = vmatmul.f32.gmra.mxu0 %v92
  %v132 = vpop.f32.mrf.mxu0
  %v133 = vadd.f32 0.0, %v132
  %134 = vmatmul.f32.gmra.mxu0 %v95
  %v135 = vpop.f32.mrf.mxu0
  %v136 = vadd.f32 0.0, %v135
  %137 = vmatmul.f32.gmra.mxu0 %v98
  %v138 = vpop.f32.mrf.mxu0
  %v139 = vadd.f32 0.0, %v138
  %140 = vmatmul.f32.gmra.mxu0 %v101
  %v141 = vpop.f32.mrf.mxu0
  %v142 = vadd.f32 0.0, %v141
  %143 = vmatmul.f32.gmra.mxu0 %v104
  %v144 = vpop.f32.mrf.mxu0
  %v145 = vadd.f32 0.0, %v144
  %146 = vdwg.mxu0
  %147 = vmatpush.msra.mxu0 0.0
  %148 = vmatpush.msra.mxu0 0.0
  %149 = vmatpush.msra.mxu0 0.0
  %150 = vmatpush.msra.mxu0 0.0
  %151 = vmatpush.msra.mxu0 0.0
  %152 = vmatpush.msra.mxu0 0.0
  %153 = vmatpush.msra.mxu0 0.0
  %154 = vmatpush.msra.mxu0 0.0
  %155 = vmatpush.msra.mxu0 0.0
  %156 = vmatpush.msra.mxu0 0.0
  %157 = vmatpush.msra.mxu0 0.0
  %158 = vmatpush.msra.mxu0 0.0
  %159 = vmatpush.msra.mxu0 0.0
  %160 = vmatpush.msra.mxu0 %v80
  %161 = vmatpush.msra.mxu0 %v78
  %162 = vmatpush.msra.mxu0 %v76
  %163 = vmatmul.f32.gmra.mxu0 %v83
  %v164 = vpop.f32.mrf.mxu0
  %v165 = vadd.f32 0.0, %v164
  %166 = vmatmul.f32.gmra.mxu0 %v86
  %v167 = vpop.f32.mrf.mxu0
  %v168 = vadd.f32 0.0, %v167
  %169 = vmatmul.f32.gmra.mxu0 %v89
  %v170 = vpop.f32.mrf.mxu0
  %v171 = vadd.f32 0.0, %v170
  %172 = vmatmul.f32.gmra.mxu0 %v92
  %v173 = vpop.f32.mrf.mxu0
  %v174 = vadd.f32 0.0, %v173
  %175 = vmatmul.f32.gmra.mxu0 %v95
  %v176 = vpop.f32.mrf.mxu0
  %v177 = vadd.f32 0.0, %v176
  %178 = vmatmul.f32.gmra.mxu0 %v98
  %v179 = vpop.f32.mrf.mxu0
  %v180 = vadd.f32 0.0, %v179
  %181 = vmatmul.f32.gmra.mxu0 %v101
  %v182 = vpop.f32.mrf.mxu0
  %v183 = vadd.f32 0.0, %v182
  %184 = vmatmul.f32.gmra.mxu0 %v104
  %v185 = vpop.f32.mrf.mxu0
  %v186 = vadd.f32 0.0, %v185
  %187 = vdwg.mxu0
  %v189 = vsel %vm81, %v44, 0
  %v192 = vsel %vm81, %v45, 0
  %v195 = vsel %vm81, %v46, 0
  %v198 = vsel %vm81, %v47, 0
  %v201 = vsel %vm81, %v48, 0
  %v204 = vsel %vm81, %v49, 0
  %v207 = vsel %vm81, %v50, 0
  %v210 = vsel %vm81, %v51, 0
  %212 = vmatpush.msra.mxu0 0.0
  %213 = vmatpush.msra.mxu0 0.0
  %214 = vmatpush.msra.mxu0 0.0
  %215 = vmatpush.msra.mxu0 0.0
  %216 = vmatpush.msra.mxu0 0.0
  %217 = vmatpush.msra.mxu0 0.0
  %218 = vmatpush.msra.mxu0 0.0
  %219 = vmatpush.msra.mxu0 0.0
  %220 = vmatpush.msra.mxu0 0.0
  %221 = vmatpush.msra.mxu0 0.0
  %222 = vmatpush.msra.mxu0 0.0
  %223 = vmatpush.msra.mxu0 0.0
  %224 = vmatpush.msra.mxu0 0.0
  %225 = vmatpush.msra.mxu0 %v72
  %226 = vmatpush.msra.mxu0 %v70
  %227 = vmatpush.msra.mxu0 %v68
  %228 = vmatmul.f32.gmra.mxu0 %v189
  %v229 = vpop.f32.mrf.mxu0
  %v230 = vadd.f32 %v124, %v229
  %231 = vmatmul.f32.gmra.mxu0 %v192
  %v232 = vpop.f32.mrf.mxu0
  %v233 = vadd.f32 %v127, %v232
  %234 = vmatmul.f32.gmra.mxu0 %v195
  %v235 = vpop.f32.mrf.mxu0
  %v236 = vadd.f32 %v130, %v235
  %237 = vmatmul.f32.gmra.mxu0 %v198
  %v238 = vpop.f32.mrf.mxu0
  %v239 = vadd.f32 %v133, %v238
  %240 = vmatmul.f32.gmra.mxu0 %v201
  %v241 = vpop.f32.mrf.mxu0
  %v242 = vadd.f32 %v136, %v241
  %243 = vmatmul.f32.gmra.mxu0 %v204
  %v244 = vpop.f32.mrf.mxu0
  %v245 = vadd.f32 %v139, %v244
  %246 = vmatmul.f32.gmra.mxu0 %v207
  %v247 = vpop.f32.mrf.mxu0
  %v248 = vadd.f32 %v142, %v247
  %249 = vmatmul.f32.gmra.mxu0 %v210
  %v250 = vpop.f32.mrf.mxu0
  %v251 = vadd.f32 %v145, %v250
  %252 = vdwg.mxu0
  %253 = vmatpush.msra.mxu0 0.0
  %254 = vmatpush.msra.mxu0 0.0
  %255 = vmatpush.msra.mxu0 0.0
  %256 = vmatpush.msra.mxu0 0.0
  %257 = vmatpush.msra.mxu0 0.0
  %258 = vmatpush.msra.mxu0 0.0
  %259 = vmatpush.msra.mxu0 0.0
  %260 = vmatpush.msra.mxu0 0.0
  %261 = vmatpush.msra.mxu0 0.0
  %262 = vmatpush.msra.mxu0 0.0
  %263 = vmatpush.msra.mxu0 0.0
  %264 = vmatpush.msra.mxu0 0.0
  %265 = vmatpush.msra.mxu0 0.0
  %266 = vmatpush.msra.mxu0 %v73
  %267 = vmatpush.msra.mxu0 %v71
  %268 = vmatpush.msra.mxu0 %v69
  %269 = vmatmul.f32.gmra.mxu0 %v189
  %v270 = vpop.f32.mrf.mxu0
  %v271 = vadd.f32 %v165, %v270
  %272 = vmatmul.f32.gmra.mxu0 %v192
  %v273 = vpop.f32.mrf.mxu0
  %v274 = vadd.f32 %v168, %v273
  %275 = vmatmul.f32.gmra.mxu0 %v195
  %v276 = vpop.f32.mrf.mxu0
  %v277 = vadd.f32 %v171, %v276
  %278 = vmatmul.f32.gmra.mxu0 %v198
  %v279 = vpop.f32.mrf.mxu0
  %v280 = vadd.f32 %v174, %v279
  %281 = vmatmul.f32.gmra.mxu0 %v201
  %v282 = vpop.f32.mrf.mxu0
  %v283 = vadd.f32 %v177, %v282
  %284 = vmatmul.f32.gmra.mxu0 %v204
  %v285 = vpop.f32.mrf.mxu0
  %v286 = vadd.f32 %v180, %v285
  %287 = vmatmul.f32.gmra.mxu0 %v207
  %v288 = vpop.f32.mrf.mxu0
  %v289 = vadd.f32 %v183, %v288
  %290 = vmatmul.f32.gmra.mxu0 %v210
  %v291 = vpop.f32.mrf.mxu0
  %v292 = vadd.f32 %v186, %v291
  %293 = vdwg.mxu0
  %v295 = vsel %vm81, %v60, 0
  %v298 = vsel %vm81, %v61, 0
  %v301 = vsel %vm81, %v62, 0
  %v304 = vsel %vm81, %v63, 0
  %v307 = vsel %vm81, %v64, 0
  %v310 = vsel %vm81, %v65, 0
  %v313 = vsel %vm81, %v66, 0
  %v316 = vsel %vm81, %v67, 0
  %318 = vmatpush.msra.mxu0 0.0
  %319 = vmatpush.msra.mxu0 0.0
  %320 = vmatpush.msra.mxu0 0.0
  %321 = vmatpush.msra.mxu0 0.0
  %322 = vmatpush.msra.mxu0 0.0
  %323 = vmatpush.msra.mxu0 0.0
  %324 = vmatpush.msra.mxu0 0.0
  %325 = vmatpush.msra.mxu0 0.0
  %326 = vmatpush.msra.mxu0 0.0
  %327 = vmatpush.msra.mxu0 0.0
  %328 = vmatpush.msra.mxu0 0.0
  %329 = vmatpush.msra.mxu0 0.0
  %330 = vmatpush.msra.mxu0 0.0
  %331 = vmatpush.msra.mxu0 %v79
  %332 = vmatpush.msra.mxu0 %v77
  %333 = vmatpush.msra.mxu0 %v75
  %334 = vmatmul.f32.gmra.mxu0 %v295
  %v335 = vpop.f32.mrf.mxu0
  %v336 = vadd.f32 0.0, %v335
  %337 = vmatmul.f32.gmra.mxu0 %v298
  %v338 = vpop.f32.mrf.mxu0
  %v339 = vadd.f32 0.0, %v338
  %340 = vmatmul.f32.gmra.mxu0 %v301
  %v341 = vpop.f32.mrf.mxu0
  %v342 = vadd.f32 0.0, %v341
  %343 = vmatmul.f32.gmra.mxu0 %v304
  %v344 = vpop.f32.mrf.mxu0
  %v345 = vadd.f32 0.0, %v344
  %346 = vmatmul.f32.gmra.mxu0 %v307
  %v347 = vpop.f32.mrf.mxu0
  %v348 = vadd.f32 0.0, %v347
  %349 = vmatmul.f32.gmra.mxu0 %v310
  %v350 = vpop.f32.mrf.mxu0
  %v351 = vadd.f32 0.0, %v350
  %352 = vmatmul.f32.gmra.mxu0 %v313
  %v353 = vpop.f32.mrf.mxu0
  %v354 = vadd.f32 0.0, %v353
  %355 = vmatmul.f32.gmra.mxu0 %v316
  %v356 = vpop.f32.mrf.mxu0
  %v357 = vadd.f32 0.0, %v356
  %358 = vdwg.mxu0
  %359 = vmatpush.msra.mxu0 0.0
  %360 = vmatpush.msra.mxu0 0.0
  %361 = vmatpush.msra.mxu0 0.0
  %362 = vmatpush.msra.mxu0 0.0
  %363 = vmatpush.msra.mxu0 0.0
  %364 = vmatpush.msra.mxu0 0.0
  %365 = vmatpush.msra.mxu0 0.0
  %366 = vmatpush.msra.mxu0 0.0
  %367 = vmatpush.msra.mxu0 0.0
  %368 = vmatpush.msra.mxu0 0.0
  %369 = vmatpush.msra.mxu0 0.0
  %370 = vmatpush.msra.mxu0 0.0
  %371 = vmatpush.msra.mxu0 0.0
  %372 = vmatpush.msra.mxu0 %v80
  %373 = vmatpush.msra.mxu0 %v78
  %374 = vmatpush.msra.mxu0 %v76
  %375 = vmatmul.f32.gmra.mxu0 %v295
  %v376 = vpop.f32.mrf.mxu0
  %v377 = vadd.f32 0.0, %v376
  %378 = vmatmul.f32.gmra.mxu0 %v298
  %v379 = vpop.f32.mrf.mxu0
  %v380 = vadd.f32 0.0, %v379
  %381 = vmatmul.f32.gmra.mxu0 %v301
  %v382 = vpop.f32.mrf.mxu0
  %v383 = vadd.f32 0.0, %v382
  %384 = vmatmul.f32.gmra.mxu0 %v304
  %v385 = vpop.f32.mrf.mxu0
  %v386 = vadd.f32 0.0, %v385
  %387 = vmatmul.f32.gmra.mxu0 %v307
  %v388 = vpop.f32.mrf.mxu0
  %v389 = vadd.f32 0.0, %v388
  %390 = vmatmul.f32.gmra.mxu0 %v310
  %v391 = vpop.f32.mrf.mxu0
  %v392 = vadd.f32 0.0, %v391
  %393 = vmatmul.f32.gmra.mxu0 %v313
  %v394 = vpop.f32.mrf.mxu0
  %v395 = vadd.f32 0.0, %v394
  %396 = vmatmul.f32.gmra.mxu0 %v316
  %v397 = vpop.f32.mrf.mxu0
  %v398 = vadd.f32 0.0, %v397
  %399 = vdwg.mxu0
  %400 = vmatpush.msra.mxu0 0.0
  %401 = vmatpush.msra.mxu0 0.0
  %402 = vmatpush.msra.mxu0 0.0
  %403 = vmatpush.msra.mxu0 0.0
  %404 = vmatpush.msra.mxu0 0.0
  %405 = vmatpush.msra.mxu0 0.0
  %406 = vmatpush.msra.mxu0 0.0
  %407 = vmatpush.msra.mxu0 0.0
  %408 = vmatpush.msra.mxu0 0.0
  %409 = vmatpush.msra.mxu0 0.0
  %410 = vmatpush.msra.mxu0 0.0
  %411 = vmatpush.msra.mxu0 0.0
  %412 = vmatpush.msra.mxu0 0.0
  %413 = vmatpush.msra.mxu0 %v72
  %414 = vmatpush.msra.mxu0 %v70
  %415 = vmatpush.msra.mxu0 %v68
  %416 = vmatmul.f32.gmra.mxu0 %v83
  %v417 = vpop.f32.mrf.mxu0
  %v418 = vadd.f32 %v336, %v417
  %419 = vmatmul.f32.gmra.mxu0 %v86
  %v420 = vpop.f32.mrf.mxu0
  %v421 = vadd.f32 %v339, %v420
  %422 = vmatmul.f32.gmra.mxu0 %v89
  %v423 = vpop.f32.mrf.mxu0
  %v424 = vadd.f32 %v342, %v423
  %425 = vmatmul.f32.gmra.mxu0 %v92
  %v426 = vpop.f32.mrf.mxu0
  %v427 = vadd.f32 %v345, %v426
  %428 = vmatmul.f32.gmra.mxu0 %v95
  %v429 = vpop.f32.mrf.mxu0
  %v430 = vadd.f32 %v348, %v429
  %431 = vmatmul.f32.gmra.mxu0 %v98
  %v432 = vpop.f32.mrf.mxu0
  %v433 = vadd.f32 %v351, %v432
  %434 = vmatmul.f32.gmra.mxu0 %v101
  %v435 = vpop.f32.mrf.mxu0
  %v436 = vadd.f32 %v354, %v435
  %437 = vmatmul.f32.gmra.mxu0 %v104
  %v438 = vpop.f32.mrf.mxu0
  %v439 = vadd.f32 %v357, %v438
  %440 = vdwg.mxu0
  %441 = vmatpush.msra.mxu0 0.0
  %442 = vmatpush.msra.mxu0 0.0
  %443 = vmatpush.msra.mxu0 0.0
  %444 = vmatpush.msra.mxu0 0.0
  %445 = vmatpush.msra.mxu0 0.0
  %446 = vmatpush.msra.mxu0 0.0
  %447 = vmatpush.msra.mxu0 0.0
  %448 = vmatpush.msra.mxu0 0.0
  %449 = vmatpush.msra.mxu0 0.0
  %450 = vmatpush.msra.mxu0 0.0
  %451 = vmatpush.msra.mxu0 0.0
  %452 = vmatpush.msra.mxu0 0.0
  %453 = vmatpush.msra.mxu0 0.0
  %454 = vmatpush.msra.mxu0 %v73
  %455 = vmatpush.msra.mxu0 %v71
  %456 = vmatpush.msra.mxu0 %v69
  %457 = vmatmul.f32.gmra.mxu0 %v83
  %v458 = vpop.f32.mrf.mxu0
  %v459 = vadd.f32 %v377, %v458
  %460 = vmatmul.f32.gmra.mxu0 %v86
  %v461 = vpop.f32.mrf.mxu0
  %v462 = vadd.f32 %v380, %v461
  %463 = vmatmul.f32.gmra.mxu0 %v89
  %v464 = vpop.f32.mrf.mxu0
  %v465 = vadd.f32 %v383, %v464
  %466 = vmatmul.f32.gmra.mxu0 %v92
  %v467 = vpop.f32.mrf.mxu0
  %v468 = vadd.f32 %v386, %v467
  %469 = vmatmul.f32.gmra.mxu0 %v95
  %v470 = vpop.f32.mrf.mxu0
  %v471 = vadd.f32 %v389, %v470
  %472 = vmatmul.f32.gmra.mxu0 %v98
  %v473 = vpop.f32.mrf.mxu0
  %v474 = vadd.f32 %v392, %v473
  %475 = vmatmul.f32.gmra.mxu0 %v101
  %v476 = vpop.f32.mrf.mxu0
  %v477 = vadd.f32 %v395, %v476
  %478 = vmatmul.f32.gmra.mxu0 %v104
  %v479 = vpop.f32.mrf.mxu0
  %v480 = vadd.f32 %v398, %v479
  %481 = vdwg.mxu0
  %v482 = vmax.f32 %v230, %v418
  %v483 = vmax.f32 %v271, %v459
  %v484 = vmax.f32 %v233, %v421
  %v485 = vmax.f32 %v274, %v462
  %v486 = vmax.f32 %v236, %v424
  %v487 = vmax.f32 %v277, %v465
  %v488 = vmax.f32 %v239, %v427
  %v489 = vmax.f32 %v280, %v468
  %v490 = vmax.f32 %v242, %v430
  %v491 = vmax.f32 %v283, %v471
  %v492 = vmax.f32 %v245, %v433
  %v493 = vmax.f32 %v286, %v474
  %v494 = vmax.f32 %v248, %v436
  %v495 = vmax.f32 %v289, %v477
  %v496 = vmax.f32 %v251, %v439
  %v497 = vmax.f32 %v292, %v480
  %v498 = vld [vmem:[%s4] sm:$0x3]
  %v500 = vperm.slane %v498, 0
  %v501 = vperm.slane %v498, 1
  %v504 = vadd.f32 %v482, %v500
  %v505 = vadd.f32 %v483, %v501
  %v506 = vadd.f32 %v484, %v500
  %v507 = vadd.f32 %v485, %v501
  %v508 = vadd.f32 %v486, %v500
  %v509 = vadd.f32 %v487, %v501
  %v510 = vadd.f32 %v488, %v500
  %v511 = vadd.f32 %v489, %v501
  %v512 = vadd.f32 %v490, %v500
  %v513 = vadd.f32 %v491, %v501
  %v514 = vadd.f32 %v492, %v500
  %v515 = vadd.f32 %v493, %v501
  %v516 = vadd.f32 %v494, %v500
  %v517 = vadd.f32 %v495, %v501
  %v518 = vadd.f32 %v496, %v500
  %v519 = vadd.f32 %v497, %v501
  %v520 = vmax.f32 %v504, 0.0
  %v521 = vmax.f32 %v505, 0.0
  %v522 = vmax.f32 %v506, 0.0
  %v523 = vmax.f32 %v507, 0.0
  %v524 = vmax.f32 %v508, 0.0
  %v525 = vmax.f32 %v509, 0.0
  %v526 = vmax.f32 %v510, 0.0
  %v527 = vmax.f32 %v511, 0.0
  %v528 = vmax.f32 %v512, 0.0
  %v529 = vmax.f32 %v513, 0.0
  %v530 = vmax.f32 %v514, 0.0
  %v531 = vmax.f32 %v515, 0.0
  %v532 = vmax.f32 %v516, 0.0
  %v533 = vmax.f32 %v517, 0.0
  %v534 = vmax.f32 %v518, 0.0
  %v535 = vmax.f32 %v519, 0.0
  %552 = vrot.lane.b32.xlu0 %v520, 112
  %v553 = vpop.permute.xlu0 %552
  %554 = vrot.lane.b32.xlu0 %v521, 112
  %v555 = vpop.permute.xlu0 %554
  %556 = vrot.lane.b32.xlu0 %v522, 112
  %v557 = vpop.permute.xlu0 %556
  %558 = vrot.lane.b32.xlu0 %v523, 112
  %v559 = vpop.permute.xlu0 %558
  %560 = vrot.lane.b32.xlu0 %v524, 112
  %v561 = vpop.permute.xlu0 %560
  %562 = vrot.lane.b32.xlu0 %v525, 112
  %v563 = vpop.permute.xlu0 %562
  %564 = vrot.lane.b32.xlu0 %v526, 112
  %v565 = vpop.permute.xlu0 %564
  %566 = vrot.lane.b32.xlu0 %v527, 112
  %v567 = vpop.permute.xlu0 %566
  %568 = vrot.lane.b32.xlu0 %v528, 112
  %v569 = vpop.permute.xlu0 %568
  %570 = vrot.lane.b32.xlu0 %v529, 112
  %v571 = vpop.permute.xlu0 %570
  %572 = vrot.lane.b32.xlu0 %v530, 112
  %v573 = vpop.permute.xlu0 %572
  %574 = vrot.lane.b32.xlu0 %v531, 112
  %v575 = vpop.permute.xlu0 %574
  %576 = vrot.lane.b32.xlu0 %v532, 112
  %v577 = vpop.permute.xlu0 %576
  %578 = vrot.lane.b32.xlu0 %v533, 112
  %v579 = vpop.permute.xlu0 %578
  %580 = vrot.lane.b32.xlu0 %v534, 112
  %v581 = vpop.permute.xlu0 %580
  %582 = vrot.lane.b32.xlu0 %v535, 112
  %v583 = vpop.permute.xlu0 %582
  %vm584 = vcmask 916480
  %v585 = vsel %vm584, %v553, %v555
  %v586 = vsel %vm584, %v557, %v559
  %v587 = vsel %vm584, %v561, %v563
  %v588 = vsel %vm584, %v565, %v567
  %v589 = vsel %vm584, %v569, %v571
  %v590 = vsel %vm584, %v573, %v575
  %v591 = vsel %vm584, %v577, %v579
  %v592 = vsel %vm584, %v581, %v583
  %v609 = vmax.f32 %v520, %v585
  %v610 = vmax.f32 %v521, %v555
  %v611 = vmax.f32 %v522, %v586
  %v612 = vmax.f32 %v523, %v559
  %v613 = vmax.f32 %v524, %v587
  %v614 = vmax.f32 %v525, %v563
  %v615 = vmax.f32 %v526, %v588
  %v616 = vmax.f32 %v527, %v567
  %v617 = vmax.f32 %v528, %v589
  %v618 = vmax.f32 %v529, %v571
  %v619 = vmax.f32 %v530, %v590
  %v620 = vmax.f32 %v531, %v575
  %v621 = vmax.f32 %v532, %v591
  %v622 = vmax.f32 %v533, %v579
  %v623 = vmax.f32 %v534, %v592
  %v624 = vmax.f32 %v535, %v583
  %v625 = vld [vmem:[%s7] sm:$0xff]
  %v626 = vld [vmem:[%s7 + $0x8] sm:$0xff]
  %v627 = vld [vmem:[%s7 + $0x10] sm:$0xff]
  %v628 = vld [vmem:[%s7 + $0x18] sm:$0xff]
  %v629 = vld [vmem:[%s7 + $0x20] sm:$0xff]
  %v630 = vld [vmem:[%s7 + $0x28] sm:$0xff]
  %v631 = vld [vmem:[%s7 + $0x30] sm:$0xff]
  %v632 = vld [vmem:[%s7 + $0x38] sm:$0xff]
  %vm633 = vcmask 523264
  %v635 = vsel %vm633, %v625, 0
  %v638 = vsel %vm633, %v626, 0
  %v641 = vsel %vm633, %v627, 0
  %v644 = vsel %vm633, %v628, 0
  %v647 = vsel %vm633, %v629, 0
  %v650 = vsel %vm633, %v630, 0
  %v653 = vsel %vm633, %v631, 0
  %v656 = vsel %vm633, %v632, 0
  %658 = vmatpush.msra.mxu0 0.0
  %659 = vmatpush.msra.mxu0 0.0
  %660 = vmatpush.msra.mxu0 0.0
  %661 = vmatpush.msra.mxu0 0.0
  %662 = vmatpush.msra.mxu0 0.0
  %663 = vmatpush.msra.mxu0 0.0
  %664 = vmatpush.msra.mxu0 0.0
  %665 = vmatpush.msra.mxu0 0.0
  %666 = vmatpush.msra.mxu0 %v623
  %667 = vmatpush.msra.mxu0 %v621
  %668 = vmatpush.msra.mxu0 %v619
  %669 = vmatpush.msra.mxu0 %v617
  %670 = vmatpush.msra.mxu0 %v615
  %671 = vmatpush.msra.mxu0 %v613
  %672 = vmatpush.msra.mxu0 %v611
  %673 = vmatpush.msra.mxu0 %v609
  %674 = vmatmul.f32.gmra.mxu0 %v635
  %v675 = vpop.f32.mrf.mxu0
  %v676 = vadd.f32 0.0, %v675
  %677 = vmatmul.f32.gmra.mxu0 %v638
  %v678 = vpop.f32.mrf.mxu0
  %v679 = vadd.f32 0.0, %v678
  %680 = vmatmul.f32.gmra.mxu0 %v641
  %v681 = vpop.f32.mrf.mxu0
  %v682 = vadd.f32 0.0, %v681
  %683 = vmatmul.f32.gmra.mxu0 %v644
  %v684 = vpop.f32.mrf.mxu0
  %v685 = vadd.f32 0.0, %v684
  %686 = vmatmul.f32.gmra.mxu0 %v647
  %v687 = vpop.f32.mrf.mxu0
  %v688 = vadd.f32 0.0, %v687
  %689 = vmatmul.f32.gmra.mxu0 %v650
  %v690 = vpop.f32.mrf.mxu0
  %v691 = vadd.f32 0.0, %v690
  %692 = vmatmul.f32.gmra.mxu0 %v653
  %v693 = vpop.f32.mrf.mxu0
  %v694 = vadd.f32 0.0, %v693
  %695 = vmatmul.f32.gmra.mxu0 %v656
  %v696 = vpop.f32.mrf.mxu0
  %v697 = vadd.f32 0.0, %v696
  %698 = vdwg.mxu0
  %699 = vmatpush.msra.mxu0 0.0
  %700 = vmatpush.msra.mxu0 0.0
  %701 = vmatpush.msra.mxu0 0.0
  %702 = vmatpush.msra.mxu0 0.0
  %703 = vmatpush.msra.mxu0 0.0
  %704 = vmatpush.msra.mxu0 0.0
  %705 = vmatpush.msra.mxu0 0.0
  %706 = vmatpush.msra.mxu0 0.0
  %707 = vmatpush.msra.mxu0 %v624
  %708 = vmatpush.msra.mxu0 %v622
  %709 = vmatpush.msra.mxu0 %v620
  %710 = vmatpush.msra.mxu0 %v618
  %711 = vmatpush.msra.mxu0 %v616
  %712 = vmatpush.msra.mxu0 %v614
  %713 = vmatpush.msra.mxu0 %v612
  %714 = vmatpush.msra.mxu0 %v610
  %715 = vmatmul.f32.gmra.mxu0 %v635
  %v716 = vpop.f32.mrf.mxu0
  %v717 = vadd.f32 0.0, %v716
  %718 = vmatmul.f32.gmra.mxu0 %v638
  %v719 = vpop.f32.mrf.mxu0
  %v720 = vadd.f32 0.0, %v719
  %721 = vmatmul.f32.gmra.mxu0 %v641
  %v722 = vpop.f32.mrf.mxu0
  %v723 = vadd.f32 0.0, %v722
  %724 = vmatmul.f32.gmra.mxu0 %v644
  %v725 = vpop.f32.mrf.mxu0
  %v726 = vadd.f32 0.0, %v725
  %727 = vmatmul.f32.gmra.mxu0 %v647
  %v728 = vpop.f32.mrf.mxu0
  %v729 = vadd.f32 0.0, %v728
  %730 = vmatmul.f32.gmra.mxu0 %v650
  %v731 = vpop.f32.mrf.mxu0
  %v732 = vadd.f32 0.0, %v731
  %733 = vmatmul.f32.gmra.mxu0 %v653
  %v734 = vpop.f32.mrf.mxu0
  %v735 = vadd.f32 0.0, %v734
  %736 = vmatmul.f32.gmra.mxu0 %v656
  %v737 = vpop.f32.mrf.mxu0
  %v738 = vadd.f32 0.0, %v737
  %739 = vdwg.mxu0
  %v740 = vld [vmem:[%s5] sm:$0xff]
  %v741 = vld [vmem:[%s5 + $0x8] sm:$0xff]
  %v742 = vld [vmem:[%s5 + $0x10] sm:$0xff]
  %v743 = vld [vmem:[%s5 + $0x18] sm:$0xff]
  %v744 = vld [vmem:[%s5 + $0x20] sm:$0xff]
  %v745 = vld [vmem:[%s5 + $0x28] sm:$0xff]
  %v746 = vld [vmem:[%s5 + $0x30] sm:$0xff]
  %v747 = vld [vmem:[%s5 + $0x38] sm:$0xff]
  %v748 = vld [vmem:[%s5 + $0x40] sm:$0xff]
  %v749 = vld [vmem:[%s5 + $0x48] sm:$0xff]
  %v750 = vld [vmem:[%s5 + $0x50] sm:$0xff]
  %v751 = vld [vmem:[%s5 + $0x58] sm:$0xff]
  %v752 = vld [vmem:[%s5 + $0x60] sm:$0xff]
  %v753 = vld [vmem:[%s5 + $0x68] sm:$0xff]
  %v754 = vld [vmem:[%s5 + $0x70] sm:$0xff]
  %v755 = vld [vmem:[%s5 + $0x78] sm:$0xff]
  %v756 = vld [vmem:[%s5 + $0x80] sm:$0xff]
  %v757 = vld [vmem:[%s5 + $0x88] sm:$0xff]
  %v758 = vld [vmem:[%s5 + $0x90] sm:$0xff]
  %v759 = vld [vmem:[%s5 + $0x98] sm:$0xff]
  %v760 = vld [vmem:[%s5 + $0xa0] sm:$0xff]
  %v761 = vld [vmem:[%s5 + $0xa8] sm:$0xff]
  %v762 = vld [vmem:[%s5 + $0xb0] sm:$0xff]
  %v763 = vld [vmem:[%s5 + $0xb8] sm:$0xff]
  %v764 = vld [vmem:[%s5 + $0xc0] sm:$0xff]
  %v765 = vld [vmem:[%s5 + $0xc8] sm:$0xff]
  %v766 = vld [vmem:[%s5 + $0xd0] sm:$0xff]
  %v767 = vld [vmem:[%s5 + $0xd8] sm:$0xff]
  %v768 = vld [vmem:[%s5 + $0xe0] sm:$0xff]
  %v769 = vld [vmem:[%s5 + $0xe8] sm:$0xff]
  %v770 = vld [vmem:[%s5 + $0xf0] sm:$0xff]
  %v771 = vld [vmem:[%s5 + $0xf8] sm:$0xff]
  %v772 = vld [vmem:[%s5 + $0x100] sm:$0xff]
  %v773 = vld [vmem:[%s5 + $0x108] sm:$0xff]
  %v774 = vld [vmem:[%s5 + $0x110] sm:$0xff]
  %v775 = vld [vmem:[%s5 + $0x118] sm:$0xff]
  %v776 = vld [vmem:[%s5 + $0x120] sm:$0xff]
  %v777 = vld [vmem:[%s5 + $0x128] sm:$0xff]
  %v778 = vld [vmem:[%s5 + $0x130] sm:$0xff]
  %v779 = vld [vmem:[%s5 + $0x138] sm:$0xff]
  %v780 = vld [vmem:[%s5 + $0x140] sm:$0xff]
  %v781 = vld [vmem:[%s5 + $0x148] sm:$0xff]
  %v782 = vld [vmem:[%s5 + $0x150] sm:$0xff]
  %v783 = vld [vmem:[%s5 + $0x158] sm:$0xff]
  %v784 = vld [vmem:[%s5 + $0x160] sm:$0xff]
  %v785 = vld [vmem:[%s5 + $0x168] sm:$0xff]
  %v786 = vld [vmem:[%s5 + $0x170] sm:$0xff]
  %v787 = vld [vmem:[%s5 + $0x178] sm:$0xff]
  %v788 = vld [vmem:[%s5 + $0x180] sm:$0xff]
  %v789 = vld [vmem:[%s5 + $0x188] sm:$0xff]
  %v790 = vld [vmem:[%s5 + $0x190] sm:$0xff]
  %v791 = vld [vmem:[%s5 + $0x198] sm:$0xff]
  %v792 = vld [vmem:[%s5 + $0x1a0] sm:$0xff]
  %v793 = vld [vmem:[%s5 + $0x1a8] sm:$0xff]
  %v794 = vld [vmem:[%s5 + $0x1b0] sm:$0xff]
  %v795 = vld [vmem:[%s5 + $0x1b8] sm:$0xff]
  %v796 = vld [vmem:[%s5 + $0x1c0] sm:$0xff]
  %v797 = vld [vmem:[%s5 + $0x1c8] sm:$0xff]
  %v798 = vld [vmem:[%s5 + $0x1d0] sm:$0xff]
  %v799 = vld [vmem:[%s5 + $0x1d8] sm:$0xff]
  %s800 = scalar_lea.vmem %s5, 480
  %v801 = vld [vmem:[%s800] sm:$0xff]
  %v802 = vld [vmem:[%s800 + $0x8] sm:$0xff]
  %v803 = vld [vmem:[%s800 + $0x10] sm:$0xff]
  %v804 = vld [vmem:[%s800 + $0x18] sm:$0xff]
  %v805 = vld [vmem:[%s800 + $0x20] sm:$0xff]
  %v806 = vld [vmem:[%s800 + $0x28] sm:$0xff]
  %v807 = vld [vmem:[%s800 + $0x30] sm:$0xff]
  %v808 = vld [vmem:[%s800 + $0x38] sm:$0xff]
  %v809 = vld [vmem:[%s800 + $0x40] sm:$0xff]
  %v810 = vld [vmem:[%s800 + $0x48] sm:$0xff]
  %v811 = vld [vmem:[%s800 + $0x50] sm:$0xff]
  %v812 = vld [vmem:[%s800 + $0x58] sm:$0xff]
  %v813 = vld [vmem:[%s800 + $0x60] sm:$0xff]
  %v814 = vld [vmem:[%s800 + $0x68] sm:$0xff]
  %v815 = vld [vmem:[%s800 + $0x70] sm:$0xff]
  %v816 = vld [vmem:[%s800 + $0x78] sm:$0xff]
  %v817 = vld [vmem:[%s800 + $0x80] sm:$0xff]
  %v818 = vld [vmem:[%s800 + $0x88] sm:$0xff]
  %v819 = vld [vmem:[%s800 + $0x90] sm:$0xff]
  %v820 = vld [vmem:[%s800 + $0x98] sm:$0xff]
  %v821 = vld [vmem:[%s800 + $0xa0] sm:$0xff]
  %v822 = vld [vmem:[%s800 + $0xa8] sm:$0xff]
  %v823 = vld [vmem:[%s800 + $0xb0] sm:$0xff]
  %v824 = vld [vmem:[%s800 + $0xb8] sm:$0xff]
  %v825 = vld [vmem:[%s800 + $0xc0] sm:$0xff]
  %v826 = vld [vmem:[%s800 + $0xc8] sm:$0xff]
  %v827 = vld [vmem:[%s800 + $0xd0] sm:$0xff]
  %v828 = vld [vmem:[%s800 + $0xd8] sm:$0xff]
  %v829 = vld [vmem:[%s800 + $0xe0] sm:$0xff]
  %v830 = vld [vmem:[%s800 + $0xe8] sm:$0xff]
  %v831 = vld [vmem:[%s800 + $0xf0] sm:$0xff]
  %v832 = vld [vmem:[%s800 + $0xf8] sm:$0xff]
  %v833 = vld [vmem:[%s800 + $0x100] sm:$0xff]
  %v834 = vld [vmem:[%s800 + $0x108] sm:$0xff]
  %v835 = vld [vmem:[%s800 + $0x110] sm:$0xff]
  %v836 = vld [vmem:[%s800 + $0x118] sm:$0xff]
  %v837 = vld [vmem:[%s800 + $0x120] sm:$0xff]
  %v838 = vld [vmem:[%s800 + $0x128] sm:$0xff]
  %v839 = vld [vmem:[%s800 + $0x130] sm:$0xff]
  %v840 = vld [vmem:[%s800 + $0x138] sm:$0xff]
  %v841 = vld [vmem:[%s800 + $0x140] sm:$0xff]
  %v842 = vld [vmem:[%s800 + $0x148] sm:$0xff]
  %v843 = vld [vmem:[%s800 + $0x150] sm:$0xff]
  %v844 = vld [vmem:[%s800 + $0x158] sm:$0xff]
  %v845 = vld [vmem:[%s800 + $0x160] sm:$0xff]
  %v846 = vld [vmem:[%s800 + $0x168] sm:$0xff]
  %v847 = vld [vmem:[%s800 + $0x170] sm:$0xff]
  %v848 = vld [vmem:[%s800 + $0x178] sm:$0xff]
  %v849 = vld [vmem:[%s800 + $0x180] sm:$0xff]
  %v850 = vld [vmem:[%s800 + $0x188] sm:$0xff]
  %v851 = vld [vmem:[%s800 + $0x190] sm:$0xff]
  %v852 = vld [vmem:[%s800 + $0x198] sm:$0xff]
  %v853 = vld [vmem:[%s800 + $0x1a0] sm:$0xff]
  %v854 = vld [vmem:[%s800 + $0x1a8] sm:$0xff]
  %v855 = vld [vmem:[%s800 + $0x1b0] sm:$0xff]
  %v856 = vld [vmem:[%s800 + $0x1b8] sm:$0xff]
  %v857 = vld [vmem:[%s800 + $0x1c0] sm:$0xff]
  %v858 = vld [vmem:[%s800 + $0x1c8] sm:$0xff]
  %v859 = vld [vmem:[%s800 + $0x1d0] sm:$0xff]
  %v860 = vld [vmem:[%s800 + $0x1d8] sm:$0xff]
  %v862 = vsel %vm584, %v610, 0
  %v865 = vsel %vm584, %v612, 0
  %v868 = vsel %vm584, %v614, 0
  %v871 = vsel %vm584, %v616, 0
  %v874 = vsel %vm584, %v618, 0
  %v877 = vsel %vm584, %v620, 0
  %v880 = vsel %vm584, %v622, 0
  %v883 = vsel %vm584, %v624, 0
  %885 = vmatpush.msra.mxu0 %v831
  %886 = vmatpush.msra.mxu0 %v829
  %887 = vmatpush.msra.mxu0 %v827
  %888 = vmatpush.msra.mxu0 %v825
  %889 = vmatpush.msra.mxu0 %v823
  %890 = vmatpush.msra.mxu0 %v821
  %891 = vmatpush.msra.mxu0 %v819
  %892 = vmatpush.msra.mxu0 %v817
  %893 = vmatpush.msra.mxu0 %v815
  %894 = vmatpush.msra.mxu0 %v813
  %895 = vmatpush.msra.mxu0 %v811
  %896 = vmatpush.msra.mxu0 %v809
  %897 = vmatpush.msra.mxu0 %v807
  %898 = vmatpush.msra.mxu0 %v805
  %899 = vmatpush.msra.mxu0 %v803
  %900 = vmatpush.msra.mxu0 %v801
  %901 = vmatmul.f32.gmra.mxu0 %v609
  %v902 = vpop.f32.mrf.mxu0
  %v903 = vadd.f32 0.0, %v902
  %904 = vmatmul.f32.gmra.mxu0 %v611
  %v905 = vpop.f32.mrf.mxu0
  %v906 = vadd.f32 0.0, %v905
  %907 = vmatmul.f32.gmra.mxu0 %v613
  %v908 = vpop.f32.mrf.mxu0
  %v909 = vadd.f32 0.0, %v908
  %910 = vmatmul.f32.gmra.mxu0 %v615
  %v911 = vpop.f32.mrf.mxu0
  %v912 = vadd.f32 0.0, %v911
  %913 = vmatmul.f32.gmra.mxu0 %v617
  %v914 = vpop.f32.mrf.mxu0
  %v915 = vadd.f32 0.0, %v914
  %916 = vmatmul.f32.gmra.mxu0 %v619
  %v917 = vpop.f32.mrf.mxu0
  %v918 = vadd.f32 0.0, %v917
  %919 = vmatmul.f32.gmra.mxu0 %v621
  %v920 = vpop.f32.mrf.mxu0
  %v921 = vadd.f32 0.0, %v920
  %922 = vmatmul.f32.gmra.mxu0 %v623
  %v923 = vpop.f32.mrf.mxu0
  %v924 = vadd.f32 0.0, %v923
  %925 = vdwg.mxu0
  %926 = vmatpush.msra.mxu0 0.0
  %927 = vmatpush.msra.mxu0 0.0
  %928 = vmatpush.msra.mxu0 %v859
  %929 = vmatpush.msra.mxu0 %v857
  %930 = vmatpush.msra.mxu0 %v855
  %931 = vmatpush.msra.mxu0 %v853
  %932 = vmatpush.msra.mxu0 %v851
  %933 = vmatpush.msra.mxu0 %v849
  %934 = vmatpush.msra.mxu0 %v847
  %935 = vmatpush.msra.mxu0 %v845
  %936 = vmatpush.msra.mxu0 %v843
  %937 = vmatpush.msra.mxu0 %v841
  %938 = vmatpush.msra.mxu0 %v839
  %939 = vmatpush.msra.mxu0 %v837
  %940 = vmatpush.msra.mxu0 %v835
  %941 = vmatpush.msra.mxu0 %v833
  %942 = vmatmul.f32.gmra.mxu0 %v862
  %v943 = vpop.f32.mrf.mxu0
  %v944 = vadd.f32 %v903, %v943
  %945 = vmatmul.f32.gmra.mxu0 %v865
  %v946 = vpop.f32.mrf.mxu0
  %v947 = vadd.f32 %v906, %v946
  %948 = vmatmul.f32.gmra.mxu0 %v868
  %v949 = vpop.f32.mrf.mxu0
  %v950 = vadd.f32 %v909, %v949
  %951 = vmatmul.f32.gmra.mxu0 %v871
  %v952 = vpop.f32.mrf.mxu0
  %v953 = vadd.f32 %v912, %v952
  %954 = vmatmul.f32.gmra.mxu0 %v874
  %v955 = vpop.f32.mrf.mxu0
  %v956 = vadd.f32 %v915, %v955
  %957 = vmatmul.f32.gmra.mxu0 %v877
  %v958 = vpop.f32.mrf.mxu0
  %v959 = vadd.f32 %v918, %v958
  %960 = vmatmul.f32.gmra.mxu0 %v880
  %v961 = vpop.f32.mrf.mxu0
  %v962 = vadd.f32 %v921, %v961
  %963 = vmatmul.f32.gmra.mxu0 %v883
  %v964 = vpop.f32.mrf.mxu0
  %v965 = vadd.f32 %v924, %v964
  %966 = vdwg.mxu0
  %967 = vmatpush.msra.mxu0 %v832
  %968 = vmatpush.msra.mxu0 %v830
  %969 = vmatpush.msra.mxu0 %v828
  %970 = vmatpush.msra.mxu0 %v826
  %971 = vmatpush.msra.mxu0 %v824
  %972 = vmatpush.msra.mxu0 %v822
  %973 = vmatpush.msra.mxu0 %v820
  %974 = vmatpush.msra.mxu0 %v818
  %975 = vmatpush.msra.mxu0 %v816
  %976 = vmatpush.msra.mxu0 %v814
  %977 = vmatpush.msra.mxu0 %v812
  %978 = vmatpush.msra.mxu0 %v810
  %979 = vmatpush.msra.mxu0 %v808
  %980 = vmatpush.msra.mxu0 %v806
  %981 = vmatpush.msra.mxu0 %v804
  %982 = vmatpush.msra.mxu0 %v802
  %983 = vmatmul.f32.gmra.mxu0 %v609
  %v984 = vpop.f32.mrf.mxu0
  %v985 = vadd.f32 0.0, %v984
  %986 = vmatmul.f32.gmra.mxu0 %v611
  %v987 = vpop.f32.mrf.mxu0
  %v988 = vadd.f32 0.0, %v987
  %989 = vmatmul.f32.gmra.mxu0 %v613
  %v990 = vpop.f32.mrf.mxu0
  %v991 = vadd.f32 0.0, %v990
  %992 = vmatmul.f32.gmra.mxu0 %v615
  %v993 = vpop.f32.mrf.mxu0
  %v994 = vadd.f32 0.0, %v993
  %995 = vmatmul.f32.gmra.mxu0 %v617
  %v996 = vpop.f32.mrf.mxu0
  %v997 = vadd.f32 0.0, %v996
  %998 = vmatmul.f32.gmra.mxu0 %v619
  %v999 = vpop.f32.mrf.mxu0
  %v1000 = vadd.f32 0.0, %v999
  %1001 = vmatmul.f32.gmra.mxu0 %v621
  %v1002 = vpop.f32.mrf.mxu0
  %v1003 = vadd.f32 0.0, %v1002
  %1004 = vmatmul.f32.gmra.mxu0 %v623
  %v1005 = vpop.f32.mrf.mxu0
  %v1006 = vadd.f32 0.0, %v1005
  %1007 = vdwg.mxu0
  %1008 = vmatpush.msra.mxu0 0.0
  %1009 = vmatpush.msra.mxu0 0.0
  %1010 = vmatpush.msra.mxu0 %v860
  %1011 = vmatpush.msra.mxu0 %v858
  %1012 = vmatpush.msra.mxu0 %v856
  %1013 = vmatpush.msra.mxu0 %v854
  %1014 = vmatpush.msra.mxu0 %v852
  %1015 = vmatpush.msra.mxu0 %v850
  %1016 = vmatpush.msra.mxu0 %v848
  %1017 = vmatpush.msra.mxu0 %v846
  %1018 = vmatpush.msra.mxu0 %v844
  %1019 = vmatpush.msra.mxu0 %v842
  %1020 = vmatpush.msra.mxu0 %v840
  %1021 = vmatpush.msra.mxu0 %v838
  %1022 = vmatpush.msra.mxu0 %v836
  %1023 = vmatpush.msra.mxu0 %v834
  %1024 = vmatmul.f32.gmra.mxu0 %v862
  %v1025 = vpop.f32.mrf.mxu0
  %v1026 = vadd.f32 %v985, %v1025
  %1027 = vmatmul.f32.gmra.mxu0 %v865
  %v1028 = vpop.f32.mrf.mxu0
  %v1029 = vadd.f32 %v988, %v1028
  %1030 = vmatmul.f32.gmra.mxu0 %v868
  %v1031 = vpop.f32.mrf.mxu0
  %v1032 = vadd.f32 %v991, %v1031
  %1033 = vmatmul.f32.gmra.mxu0 %v871
  %v1034 = vpop.f32.mrf.mxu0
  %v1035 = vadd.f32 %v994, %v1034
  %1036 = vmatmul.f32.gmra.mxu0 %v874
  %v1037 = vpop.f32.mrf.mxu0
  %v1038 = vadd.f32 %v997, %v1037
  %1039 = vmatmul.f32.gmra.mxu0 %v877
  %v1040 = vpop.f32.mrf.mxu0
  %v1041 = vadd.f32 %v1000, %v1040
  %1042 = vmatmul.f32.gmra.mxu0 %v880
  %v1043 = vpop.f32.mrf.mxu0
  %v1044 = vadd.f32 %v1003, %v1043
  %1045 = vmatmul.f32.gmra.mxu0 %v883
  %v1046 = vpop.f32.mrf.mxu0
  %v1047 = vadd.f32 %v1006, %v1046
  %1048 = vdwg.mxu0
  %v1050 = vsel %vm584, %v717, 0
  %v1053 = vsel %vm584, %v720, 0
  %v1056 = vsel %vm584, %v723, 0
  %v1059 = vsel %vm584, %v726, 0
  %v1062 = vsel %vm584, %v729, 0
  %v1065 = vsel %vm584, %v732, 0
  %v1068 = vsel %vm584, %v735, 0
  %v1071 = vsel %vm584, %v738, 0
  %1073 = vmatpush.msra.mxu0 %v770
  %1074 = vmatpush.msra.mxu0 %v768
  %1075 = vmatpush.msra.mxu0 %v766
  %1076 = vmatpush.msra.mxu0 %v764
  %1077 = vmatpush.msra.mxu0 %v762
  %1078 = vmatpush.msra.mxu0 %v760
  %1079 = vmatpush.msra.mxu0 %v758
  %1080 = vmatpush.msra.mxu0 %v756
  %1081 = vmatpush.msra.mxu0 %v754
  %1082 = vmatpush.msra.mxu0 %v752
  %1083 = vmatpush.msra.mxu0 %v750
  %1084 = vmatpush.msra.mxu0 %v748
  %1085 = vmatpush.msra.mxu0 %v746
  %1086 = vmatpush.msra.mxu0 %v744
  %1087 = vmatpush.msra.mxu0 %v742
  %1088 = vmatpush.msra.mxu0 %v740
  %1089 = vmatmul.f32.gmra.mxu0 %v676
  %v1090 = vpop.f32.mrf.mxu0
  %v1091 = vadd.f32 %v944, %v1090
  %1092 = vmatmul.f32.gmra.mxu0 %v679
  %v1093 = vpop.f32.mrf.mxu0
  %v1094 = vadd.f32 %v947, %v1093
  %1095 = vmatmul.f32.gmra.mxu0 %v682
  %v1096 = vpop.f32.mrf.mxu0
  %v1097 = vadd.f32 %v950, %v1096
  %1098 = vmatmul.f32.gmra.mxu0 %v685
  %v1099 = vpop.f32.mrf.mxu0
  %v1100 = vadd.f32 %v953, %v1099
  %1101 = vmatmul.f32.gmra.mxu0 %v688
  %v1102 = vpop.f32.mrf.mxu0
  %v1103 = vadd.f32 %v956, %v1102
  %1104 = vmatmul.f32.gmra.mxu0 %v691
  %v1105 = vpop.f32.mrf.mxu0
  %v1106 = vadd.f32 %v959, %v1105
  %1107 = vmatmul.f32.gmra.mxu0 %v694
  %v1108 = vpop.f32.mrf.mxu0
  %v1109 = vadd.f32 %v962, %v1108
  %1110 = vmatmul.f32.gmra.mxu0 %v697
  %v1111 = vpop.f32.mrf.mxu0
  %v1112 = vadd.f32 %v965, %v1111
  %1113 = vdwg.mxu0
  %1114 = vmatpush.msra.mxu0 0.0
  %1115 = vmatpush.msra.mxu0 0.0
  %1116 = vmatpush.msra.mxu0 %v798
  %1117 = vmatpush.msra.mxu0 %v796
  %1118 = vmatpush.msra.mxu0 %v794
  %1119 = vmatpush.msra.mxu0 %v792
  %1120 = vmatpush.msra.mxu0 %v790
  %1121 = vmatpush.msra.mxu0 %v788
  %1122 = vmatpush.msra.mxu0 %v786
  %1123 = vmatpush.msra.mxu0 %v784
  %1124 = vmatpush.msra.mxu0 %v782
  %1125 = vmatpush.msra.mxu0 %v780
  %1126 = vmatpush.msra.mxu0 %v778
  %1127 = vmatpush.msra.mxu0 %v776
  %1128 = vmatpush.msra.mxu0 %v774
  %1129 = vmatpush.msra.mxu0 %v772
  %1130 = vmatmul.f32.gmra.mxu0 %v1050
  %v1131 = vpop.f32.mrf.mxu0
  %v1132 = vadd.f32 %v1091, %v1131
  %1133 = vmatmul.f32.gmra.mxu0 %v1053
  %v1134 = vpop.f32.mrf.mxu0
  %v1135 = vadd.f32 %v1094, %v1134
  %1136 = vmatmul.f32.gmra.mxu0 %v1056
  %v1137 = vpop.f32.mrf.mxu0
  %v1138 = vadd.f32 %v1097, %v1137
  %1139 = vmatmul.f32.gmra.mxu0 %v1059
  %v1140 = vpop.f32.mrf.mxu0
  %v1141 = vadd.f32 %v1100, %v1140
  %1142 = vmatmul.f32.gmra.mxu0 %v1062
  %v1143 = vpop.f32.mrf.mxu0
  %v1144 = vadd.f32 %v1103, %v1143
  %1145 = vmatmul.f32.gmra.mxu0 %v1065
  %v1146 = vpop.f32.mrf.mxu0
  %v1147 = vadd.f32 %v1106, %v1146
  %1148 = vmatmul.f32.gmra.mxu0 %v1068
  %v1149 = vpop.f32.mrf.mxu0
  %v1150 = vadd.f32 %v1109, %v1149
  %1151 = vmatmul.f32.gmra.mxu0 %v1071
  %v1152 = vpop.f32.mrf.mxu0
  %v1153 = vadd.f32 %v1112, %v1152
  %1154 = vdwg.mxu0
  %1155 = vmatpush.msra.mxu0 %v771
  %1156 = vmatpush.msra.mxu0 %v769
  %1157 = vmatpush.msra.mxu0 %v767
  %1158 = vmatpush.msra.mxu0 %v765
  %1159 = vmatpush.msra.mxu0 %v763
  %1160 = vmatpush.msra.mxu0 %v761
  %1161 = vmatpush.msra.mxu0 %v759
  %1162 = vmatpush.msra.mxu0 %v757
  %1163 = vmatpush.msra.mxu0 %v755
  %1164 = vmatpush.msra.mxu0 %v753
  %1165 = vmatpush.msra.mxu0 %v751
  %1166 = vmatpush.msra.mxu0 %v749
  %1167 = vmatpush.msra.mxu0 %v747
  %1168 = vmatpush.msra.mxu0 %v745
  %1169 = vmatpush.msra.mxu0 %v743
  %1170 = vmatpush.msra.mxu0 %v741
  %1171 = vmatmul.f32.gmra.mxu0 %v676
  %v1172 = vpop.f32.mrf.mxu0
  %v1173 = vadd.f32 %v1026, %v1172
  %1174 = vmatmul.f32.gmra.mxu0 %v679
  %v1175 = vpop.f32.mrf.mxu0
  %v1176 = vadd.f32 %v1029, %v1175
  %1177 = vmatmul.f32.gmra.mxu0 %v682
  %v1178 = vpop.f32.mrf.mxu0
  %v1179 = vadd.f32 %v1032, %v1178
  %1180 = vmatmul.f32.gmra.mxu0 %v685
  %v1181 = vpop.f32.mrf.mxu0
  %v1182 = vadd.f32 %v1035, %v1181
  %1183 = vmatmul.f32.gmra.mxu0 %v688
  %v1184 = vpop.f32.mrf.mxu0
  %v1185 = vadd.f32 %v1038, %v1184
  %1186 = vmatmul.f32.gmra.mxu0 %v691
  %v1187 = vpop.f32.mrf.mxu0
  %v1188 = vadd.f32 %v1041, %v1187
  %1189 = vmatmul.f32.gmra.mxu0 %v694
  %v1190 = vpop.f32.mrf.mxu0
  %v1191 = vadd.f32 %v1044, %v1190
  %1192 = vmatmul.f32.gmra.mxu0 %v697
  %v1193 = vpop.f32.mrf.mxu0
  %v1194 = vadd.f32 %v1047, %v1193
  %1195 = vdwg.mxu0
  %1196 = vmatpush.msra.mxu0 0.0
  %1197 = vmatpush.msra.mxu0 0.0
  %1198 = vmatpush.msra.mxu0 %v799
  %1199 = vmatpush.msra.mxu0 %v797
  %1200 = vmatpush.msra.mxu0 %v795
  %1201 = vmatpush.msra.mxu0 %v793
  %1202 = vmatpush.msra.mxu0 %v791
  %1203 = vmatpush.msra.mxu0 %v789
  %1204 = vmatpush.msra.mxu0 %v787
  %1205 = vmatpush.msra.mxu0 %v785
  %1206 = vmatpush.msra.mxu0 %v783
  %1207 = vmatpush.msra.mxu0 %v781
  %1208 = vmatpush.msra.mxu0 %v779
  %1209 = vmatpush.msra.mxu0 %v777
  %1210 = vmatpush.msra.mxu0 %v775
  %1211 = vmatpush.msra.mxu0 %v773
  %1212 = vmatmul.f32.gmra.mxu0 %v1050
  %v1213 = vpop.f32.mrf.mxu0
  %v1214 = vadd.f32 %v1173, %v1213
  %1215 = vmatmul.f32.gmra.mxu0 %v1053
  %v1216 = vpop.f32.mrf.mxu0
  %v1217 = vadd.f32 %v1176, %v1216
  %1218 = vmatmul.f32.gmra.mxu0 %v1056
  %v1219 = vpop.f32.mrf.mxu0
  %v1220 = vadd.f32 %v1179, %v1219
  %1221 = vmatmul.f32.gmra.mxu0 %v1059
  %v1222 = vpop.f32.mrf.mxu0
  %v1223 = vadd.f32 %v1182, %v1222
  %1224 = vmatmul.f32.gmra.mxu0 %v1062
  %v1225 = vpop.f32.mrf.mxu0
  %v1226 = vadd.f32 %v1185, %v1225
  %1227 = vmatmul.f32.gmra.mxu0 %v1065
  %v1228 = vpop.f32.mrf.mxu0
  %v1229 = vadd.f32 %v1188, %v1228
  %1230 = vmatmul.f32.gmra.mxu0 %v1068
  %v1231 = vpop.f32.mrf.mxu0
  %v1232 = vadd.f32 %v1191, %v1231
  %1233 = vmatmul.f32.gmra.mxu0 %v1071
  %v1234 = vpop.f32.mrf.mxu0
  %v1235 = vadd.f32 %v1194, %v1234
  %1236 = vdwg.mxu0
  %v1237 = vld [vmem:[%s6] sm:$0x3]
  %v1239 = vperm.slane %v1237, 0
  %v1240 = vperm.slane %v1237, 1
  %v1243 = vadd.f32 %v1132, %v1239
  %v1244 = vadd.f32 %v1214, %v1240
  %v1245 = vadd.f32 %v1135, %v1239
  %v1246 = vadd.f32 %v1217, %v1240
  %v1247 = vadd.f32 %v1138, %v1239
  %v1248 = vadd.f32 %v1220, %v1240
  %v1249 = vadd.f32 %v1141, %v1239
  %v1250 = vadd.f32 %v1223, %v1240
  %v1251 = vadd.f32 %v1144, %v1239
  %v1252 = vadd.f32 %v1226, %v1240
  %v1253 = vadd.f32 %v1147, %v1239
  %v1254 = vadd.f32 %v1229, %v1240
  %v1255 = vadd.f32 %v1150, %v1239
  %v1256 = vadd.f32 %v1232, %v1240
  %v1257 = vadd.f32 %v1153, %v1239
  %v1258 = vadd.f32 %v1235, %v1240
  %v1259 = vmax.f32 %v1243, 0.0
  %v1260 = vmax.f32 %v1244, 0.0
  %v1261 = vmax.f32 %v1245, 0.0
  %v1262 = vmax.f32 %v1246, 0.0
  %v1263 = vmax.f32 %v1247, 0.0
  %v1264 = vmax.f32 %v1248, 0.0
  %v1265 = vmax.f32 %v1249, 0.0
  %v1266 = vmax.f32 %v1250, 0.0
  %v1267 = vmax.f32 %v1251, 0.0
  %v1268 = vmax.f32 %v1252, 0.0
  %v1269 = vmax.f32 %v1253, 0.0
  %v1270 = vmax.f32 %v1254, 0.0
  %v1271 = vmax.f32 %v1255, 0.0
  %v1272 = vmax.f32 %v1256, 0.0
  %v1273 = vmax.f32 %v1257, 0.0
  %v1274 = vmax.f32 %v1258, 0.0
  %1291 = vrot.lane.b32.xlu0 %v1259, 96
  %v1292 = vpop.permute.xlu0 %1291
  %1293 = vrot.lane.b32.xlu0 %v1260, 96
  %v1294 = vpop.permute.xlu0 %1293
  %1295 = vrot.lane.b32.xlu0 %v1261, 96
  %v1296 = vpop.permute.xlu0 %1295
  %1297 = vrot.lane.b32.xlu0 %v1262, 96
  %v1298 = vpop.permute.xlu0 %1297
  %1299 = vrot.lane.b32.xlu0 %v1263, 96
  %v1300 = vpop.permute.xlu0 %1299
  %1301 = vrot.lane.b32.xlu0 %v1264, 96
  %v1302 = vpop.permute.xlu0 %1301
  %1303 = vrot.lane.b32.xlu0 %v1265, 96
  %v1304 = vpop.permute.xlu0 %1303
  %1305 = vrot.lane.b32.xlu0 %v1266, 96
  %v1306 = vpop.permute.xlu0 %1305
  %1307 = vrot.lane.b32.xlu0 %v1267, 96
  %v1308 = vpop.permute.xlu0 %1307
  %1309 = vrot.lane.b32.xlu0 %v1268, 96
  %v1310 = vpop.permute.xlu0 %1309
  %1311 = vrot.lane.b32.xlu0 %v1269, 96
  %v1312 = vpop.permute.xlu0 %1311
  %1313 = vrot.lane.b32.xlu0 %v1270, 96
  %v1314 = vpop.permute.xlu0 %1313
  %1315 = vrot.lane.b32.xlu0 %v1271, 96
  %v1316 = vpop.permute.xlu0 %1315
  %1317 = vrot.lane.b32.xlu0 %v1272, 96
  %v1318 = vpop.permute.xlu0 %1317
  %1319 = vrot.lane.b32.xlu0 %v1273, 96
  %v1320 = vpop.permute.xlu0 %1319
  %1321 = vrot.lane.b32.xlu0 %v1274, 96
  %v1322 = vpop.permute.xlu0 %1321
  %vm1323 = vcmask 785408
  %v1324 = vsel %vm1323, %v1292, %v1294
  %v1325 = vsel %vm1323, %v1296, %v1298
  %v1326 = vsel %vm1323, %v1300, %v1302
  %v1327 = vsel %vm1323, %v1304, %v1306
  %v1328 = vsel %vm1323, %v1308, %v1310
  %v1329 = vsel %vm1323, %v1312, %v1314
  %v1330 = vsel %vm1323, %v1316, %v1318
  %v1331 = vsel %vm1323, %v1320, %v1322
  %v1348 = vmax.f32 %v1259, %v1324
  %v1349 = vmax.f32 %v1260, %v1294
  %v1350 = vmax.f32 %v1261, %v1325
  %v1351 = vmax.f32 %v1262, %v1298
  %v1352 = vmax.f32 %v1263, %v1326
  %v1353 = vmax.f32 %v1264, %v1302
  %v1354 = vmax.f32 %v1265, %v1327
  %v1355 = vmax.f32 %v1266, %v1306
  %v1356 = vmax.f32 %v1267, %v1328
  %v1357 = vmax.f32 %v1268, %v1310
  %v1358 = vmax.f32 %v1269, %v1329
  %v1359 = vmax.f32 %v1270, %v1314
  %v1360 = vmax.f32 %v1271, %v1330
  %v1361 = vmax.f32 %v1272, %v1318
  %v1362 = vmax.f32 %v1273, %v1331
  %v1363 = vmax.f32 %v1274, %v1322
  %v1364 = vld [vmem:[%s2] sm:$0xff]
  %v1365 = vld [vmem:[%s9] sm:$0x3]
  %v1366 = vld [vmem:[%s10] sm:$0x1]
  %v1368 = vperm.slane %v1366, 0
  %vm1370 = vcmask 15360
  %v1372 = vsel %vm1370, %v1364, 0
  %vm1374 = vcmask 1041408
  %v1376 = vsel %vm1374, %v1365, 0
  %1378 = vmatpush.msra.mxu0 0.0
  %1379 = vmatpush.msra.mxu0 0.0
  %1380 = vmatpush.msra.mxu0 0.0
  %1381 = vmatpush.msra.mxu0 0.0
  %1382 = vmatpush.msra.mxu0 0.0
  %1383 = vmatpush.msra.mxu0 0.0
  %1384 = vmatpush.msra.mxu0 0.0
  %1385 = vmatpush.msra.mxu0 0.0
  %1386 = vmatpush.msra.mxu0 0.0
  %1387 = vmatpush.msra.mxu0 0.0
  %1388 = vmatpush.msra.mxu0 0.0
  %1389 = vmatpush.msra.mxu0 0.0
  %1390 = vmatpush.msra.mxu0 0.0
  %1391 = vmatpush.msra.mxu0 0.0
  %1392 = vmatpush.msra.mxu0 0.0
  %1393 = vmatpush.msra.mxu0 %v1376
  %1394 = vmatmul.f32.gmra.mxu0 %v1372
  %v1395 = vpop.f32.mrf.mxu0
  %v1396 = vadd.f32 %v1368, %v1395
  %1397 = vdwg.mxu0
  %v1414 = vrot.slane %v1348, 1
  %v1415 = vrot.slane %v1349, 1
  %v1416 = vrot.slane %v1350, 1
  %v1417 = vrot.slane %v1351, 1
  %v1418 = vrot.slane %v1352, 1
  %v1419 = vrot.slane %v1353, 1
  %v1420 = vrot.slane %v1354, 1
  %v1421 = vrot.slane %v1355, 1
  %v1422 = vrot.slane %v1356, 1
  %v1423 = vrot.slane %v1357, 1
  %v1424 = vrot.slane %v1358, 1
  %v1425 = vrot.slane %v1359, 1
  %v1426 = vrot.slane %v1360, 1
  %v1427 = vrot.slane %v1361, 1
  %v1428 = vrot.slane %v1362, 1
  %v1429 = vrot.slane %v1363, 1
  %v1446 = vmax.f32 %v1348, %v1414
  %v1447 = vmax.f32 %v1349, %v1415
  %v1448 = vmax.f32 %v1350, %v1416
  %v1449 = vmax.f32 %v1351, %v1417
  %v1450 = vmax.f32 %v1352, %v1418
  %v1451 = vmax.f32 %v1353, %v1419
  %v1452 = vmax.f32 %v1354, %v1420
  %v1453 = vmax.f32 %v1355, %v1421
  %v1454 = vmax.f32 %v1356, %v1422
  %v1455 = vmax.f32 %v1357, %v1423
  %v1456 = vmax.f32 %v1358, %v1424
  %v1457 = vmax.f32 %v1359, %v1425
  %v1458 = vmax.f32 %v1360, %v1426
  %v1459 = vmax.f32 %v1361, %v1427
  %v1460 = vmax.f32 %v1362, %v1428
  %v1461 = vmax.f32 %v1363, %v1429
  %v1462 = vld [vmem:[%s8] sm:$0xff]
  %v1463 = vld [vmem:[%s8 + $0x8] sm:$0xff]
  %v1464 = vld [vmem:[%s8 + $0x10] sm:$0xff]
  %v1465 = vld [vmem:[%s8 + $0x18] sm:$0xff]
  %v1466 = vld [vmem:[%s8 + $0x20] sm:$0xff]
  %v1467 = vld [vmem:[%s8 + $0x28] sm:$0xff]
  %v1468 = vld [vmem:[%s8 + $0x30] sm:$0xff]
  %v1469 = vld [vmem:[%s8 + $0x38] sm:$0xff]
  %v1470 = vld [vmem:[%s8 + $0x40] sm:$0xff]
  %v1471 = vld [vmem:[%s8 + $0x48] sm:$0xff]
  %v1472 = vld [vmem:[%s8 + $0x50] sm:$0xff]
  %v1473 = vld [vmem:[%s8 + $0x58] sm:$0xff]
  %v1474 = vld [vmem:[%s8 + $0x60] sm:$0xff]
  %v1475 = vld [vmem:[%s8 + $0x68] sm:$0xff]
  %v1476 = vld [vmem:[%s8 + $0x70] sm:$0xff]
  %v1477 = vld [vmem:[%s8 + $0x78] sm:$0xff]
  %v1478 = vld [vmem:[%s8 + $0x80] sm:$0xff]
  %v1479 = vld [vmem:[%s8 + $0x88] sm:$0xff]
  %v1480 = vld [vmem:[%s8 + $0x90] sm:$0xff]
  %v1481 = vld [vmem:[%s8 + $0x98] sm:$0xff]
  %v1482 = vld [vmem:[%s8 + $0xa0] sm:$0xff]
  %v1483 = vld [vmem:[%s8 + $0xa8] sm:$0xff]
  %v1484 = vld [vmem:[%s8 + $0xb0] sm:$0xff]
  %v1485 = vld [vmem:[%s8 + $0xb8] sm:$0xff]
  %v1486 = vld [vmem:[%s8 + $0xc0] sm:$0xff]
  %v1487 = vld [vmem:[%s8 + $0xc8] sm:$0xff]
  %v1488 = vld [vmem:[%s8 + $0xd0] sm:$0xff]
  %v1489 = vld [vmem:[%s8 + $0xd8] sm:$0xff]
  %v1506 = vrot.slane %v1448, 7
  %vm1507 = vcmask 1041409
  %v1508 = vsel %vm1507, %v1506, %v1446
  %v1509 = vrot.slane %v1450, 6
  %vm1510 = vcmask 1042434
  %v1511 = vsel %vm1510, %v1509, %v1508
  %v1512 = vrot.slane %v1452, 5
  %vm1513 = vcmask 1043459
  %v1514 = vsel %vm1513, %v1512, %v1511
  %v1515 = vrot.slane %v1454, 4
  %vm1516 = vcmask 1044484
  %v1517 = vsel %vm1516, %v1515, %v1514
  %v1518 = vrot.slane %v1456, 3
  %vm1519 = vcmask 1045509
  %v1520 = vsel %vm1519, %v1518, %v1517
  %v1521 = vrot.slane %v1458, 2
  %vm1522 = vcmask 1046534
  %v1523 = vsel %vm1522, %v1521, %v1520
  %v1524 = vrot.slane %v1460, 1
  %vm1525 = vcmask 1047559
  %v1526 = vsel %vm1525, %v1524, %v1523
  %v1527 = vrot.slane %v1449, 7
  %v1528 = vsel %vm1507, %v1527, %v1447
  %v1529 = vrot.slane %v1451, 6
  %v1530 = vsel %vm1510, %v1529, %v1528
  %v1531 = vrot.slane %v1453, 5
  %v1532 = vsel %vm1513, %v1531, %v1530
  %v1533 = vrot.slane %v1455, 4
  %v1534 = vsel %vm1516, %v1533, %v1532
  %v1535 = vrot.slane %v1457, 3
  %v1536 = vsel %vm1519, %v1535, %v1534
  %v1537 = vrot.slane %v1459, 2
  %v1538 = vsel %vm1522, %v1537, %v1536
  %v1539 = vrot.slane %v1461, 1
  %v1540 = vsel %vm1525, %v1539, %v1538
  %v1542 = vsel %vm1323, %v1540, 0
  %1544 = vmatpush.msra.mxu0 %v1477
  %1545 = vmatpush.msra.mxu0 %v1476
  %1546 = vmatpush.msra.mxu0 %v1475
  %1547 = vmatpush.msra.mxu0 %v1474
  %1548 = vmatpush.msra.mxu0 %v1473
  %1549 = vmatpush.msra.mxu0 %v1472
  %1550 = vmatpush.msra.mxu0 %v1471
  %1551 = vmatpush.msra.mxu0 %v1470
  %1552 = vmatpush.msra.mxu0 %v1469
  %1553 = vmatpush.msra.mxu0 %v1468
  %1554 = vmatpush.msra.mxu0 %v1467
  %1555 = vmatpush.msra.mxu0 %v1466
  %1556 = vmatpush.msra.mxu0 %v1465
  %1557 = vmatpush.msra.mxu0 %v1464
  %1558 = vmatpush.msra.mxu0 %v1463
  %1559 = vmatpush.msra.mxu0 %v1462
  %1560 = vmatmul.f32.gmra.mxu0 %v1526
  %v1561 = vpop.f32.mrf.mxu0
  %v1562 = vadd.f32 0.0, %v1561
  %1563 = vdwg.mxu0
  %1564 = vmatpush.msra.mxu0 0.0
  %1565 = vmatpush.msra.mxu0 0.0
  %1566 = vmatpush.msra.mxu0 0.0
  %1567 = vmatpush.msra.mxu0 0.0
  %1568 = vmatpush.msra.mxu0 %v1489
  %1569 = vmatpush.msra.mxu0 %v1488
  %1570 = vmatpush.msra.mxu0 %v1487
  %1571 = vmatpush.msra.mxu0 %v1486
  %1572 = vmatpush.msra.mxu0 %v1485
  %1573 = vmatpush.msra.mxu0 %v1484
  %1574 = vmatpush.msra.mxu0 %v1483
  %1575 = vmatpush.msra.mxu0 %v1482
  %1576 = vmatpush.msra.mxu0 %v1481
  %1577 = vmatpush.msra.mxu0 %v1480
  %1578 = vmatpush.msra.mxu0 %v1479
  %1579 = vmatpush.msra.mxu0 %v1478
  %1580 = vmatmul.f32.gmra.mxu0 %v1542
  %v1581 = vpop.f32.mrf.mxu0
  %v1582 = vadd.f32 %v1562, %v1581
  %1583 = vdwg.mxu0
  %v1584 = vadd.f32 %v1396, %v1582
  %s1585 = scalar_lea.vmem %s8, 224
  %v1586 = vld [vmem:[%s1585] sm:$0xff]
  %v1587 = vld [vmem:[%s1585 + $0x8] sm:$0xff]
  %v1588 = vld [vmem:[%s1585 + $0x10] sm:$0xff]
  %v1589 = vld [vmem:[%s1585 + $0x18] sm:$0xff]
  %v1590 = vld [vmem:[%s1585 + $0x20] sm:$0xff]
  %v1591 = vld [vmem:[%s1585 + $0x28] sm:$0xff]
  %v1592 = vld [vmem:[%s1585 + $0x30] sm:$0xff]
  %v1593 = vld [vmem:[%s1585 + $0x38] sm:$0xff]
  %v1594 = vld [vmem:[%s1585 + $0x40] sm:$0xff]
  %v1595 = vld [vmem:[%s1585 + $0x48] sm:$0xff]
  %v1596 = vld [vmem:[%s1585 + $0x50] sm:$0xff]
  %v1597 = vld [vmem:[%s1585 + $0x58] sm:$0xff]
  %v1598 = vld [vmem:[%s1585 + $0x60] sm:$0xff]
  %v1599 = vld [vmem:[%s1585 + $0x68] sm:$0xff]
  %v1600 = vld [vmem:[%s1585 + $0x70] sm:$0xff]
  %v1601 = vld [vmem:[%s1585 + $0x78] sm:$0xff]
  %v1602 = vld [vmem:[%s1585 + $0x80] sm:$0xff]
  %v1603 = vld [vmem:[%s1585 + $0x88] sm:$0xff]
  %v1604 = vld [vmem:[%s1585 + $0x90] sm:$0xff]
  %v1605 = vld [vmem:[%s1585 + $0x98] sm:$0xff]
  %v1606 = vld [vmem:[%s1585 + $0xa0] sm:$0xff]
  %v1607 = vld [vmem:[%s1585 + $0xa8] sm:$0xff]
  %v1608 = vld [vmem:[%s1585 + $0xb0] sm:$0xff]
  %v1609 = vld [vmem:[%s1585 + $0xb8] sm:$0xff]
  %v1610 = vld [vmem:[%s1585 + $0xc0] sm:$0xff]
  %v1611 = vld [vmem:[%s1585 + $0xc8] sm:$0xff]
  %v1612 = vld [vmem:[%s1585 + $0xd0] sm:$0xff]
  %v1613 = vld [vmem:[%s1585 + $0xd8] sm:$0xff]
  %v1614 = vrot.slane %v1446, 2
  %v1615 = vrot.slane %v1448, 1
  %v1616 = vsel %vm1507, %v1615, %v1614
  %v1617 = vsel %vm1510, %v1450, %v1616
  %v1618 = vrot.slane %v1452, 7
  %v1619 = vsel %vm1513, %v1618, %v1617
  %v1620 = vrot.slane %v1454, 6
  %v1621 = vsel %vm1516, %v1620, %v1619
  %v1622 = vrot.slane %v1456, 5
  %v1623 = vsel %vm1519, %v1622, %v1621
  %v1624 = vrot.slane %v1458, 4
  %v1625 = vsel %vm1522, %v1624, %v1623
  %v1626 = vrot.slane %v1460, 3
  %v1627 = vsel %vm1525, %v1626, %v1625
  %v1628 = vrot.slane %v1447, 2
  %v1629 = vrot.slane %v1449, 1
  %v1630 = vsel %vm1507, %v1629, %v1628
  %v1631 = vsel %vm1510, %v1451, %v1630
  %v1632 = vrot.slane %v1453, 7
  %v1633 = vsel %vm1513, %v1632, %v1631
  %v1634 = vrot.slane %v1455, 6
  %v1635 = vsel %vm1516, %v1634, %v1633
  %v1636 = vrot.slane %v1457, 5
  %v1637 = vsel %vm1519, %v1636, %v1635
  %v1638 = vrot.slane %v1459, 4
  %v1639 = vsel %vm1522, %v1638, %v1637
  %v1640 = vrot.slane %v1461, 3
  %v1641 = vsel %vm1525, %v1640, %v1639
  %v1643 = vsel %vm1323, %v1641, 0
  %1645 = vmatpush.msra.mxu0 %v1601
  %1646 = vmatpush.msra.mxu0 %v1600
  %1647 = vmatpush.msra.mxu0 %v1599
  %1648 = vmatpush.msra.mxu0 %v1598
  %1649 = vmatpush.msra.mxu0 %v1597
  %1650 = vmatpush.msra.mxu0 %v1596
  %1651 = vmatpush.msra.mxu0 %v1595
  %1652 = vmatpush.msra.mxu0 %v1594
  %1653 = vmatpush.msra.mxu0 %v1593
  %1654 = vmatpush.msra.mxu0 %v1592
  %1655 = vmatpush.msra.mxu0 %v1591
  %1656 = vmatpush.msra.mxu0 %v1590
  %1657 = vmatpush.msra.mxu0 %v1589
  %1658 = vmatpush.msra.mxu0 %v1588
  %1659 = vmatpush.msra.mxu0 %v1587
  %1660 = vmatpush.msra.mxu0 %v1586
  %1661 = vmatmul.f32.gmra.mxu0 %v1627
  %v1662 = vpop.f32.mrf.mxu0
  %v1663 = vadd.f32 0.0, %v1662
  %1664 = vdwg.mxu0
  %1665 = vmatpush.msra.mxu0 0.0
  %1666 = vmatpush.msra.mxu0 0.0
  %1667 = vmatpush.msra.mxu0 0.0
  %1668 = vmatpush.msra.mxu0 0.0
  %1669 = vmatpush.msra.mxu0 %v1613
  %1670 = vmatpush.msra.mxu0 %v1612
  %1671 = vmatpush.msra.mxu0 %v1611
  %1672 = vmatpush.msra.mxu0 %v1610
  %1673 = vmatpush.msra.mxu0 %v1609
  %1674 = vmatpush.msra.mxu0 %v1608
  %1675 = vmatpush.msra.mxu0 %v1607
  %1676 = vmatpush.msra.mxu0 %v1606
  %1677 = vmatpush.msra.mxu0 %v1605
  %1678 = vmatpush.msra.mxu0 %v1604
  %1679 = vmatpush.msra.mxu0 %v1603
  %1680 = vmatpush.msra.mxu0 %v1602
  %1681 = vmatmul.f32.gmra.mxu0 %v1643
  %v1682 = vpop.f32.mrf.mxu0
  %v1683 = vadd.f32 %v1663, %v1682
  %1684 = vdwg.mxu0
  %v1685 = vadd.f32 %v1584, %v1683
  %s1686 = scalar_lea.vmem %s8, 448
  %v1687 = vld [vmem:[%s1686] sm:$0xff]
  %v1688 = vld [vmem:[%s1686 + $0x8] sm:$0xff]
  %v1689 = vld [vmem:[%s1686 + $0x10] sm:$0xff]
  %v1690 = vld [vmem:[%s1686 + $0x18] sm:$0xff]
  %v1691 = vld [vmem:[%s1686 + $0x20] sm:$0xff]
  %v1692 = vld [vmem:[%s1686 + $0x28] sm:$0xff]
  %v1693 = vld [vmem:[%s1686 + $0x30] sm:$0xff]
  %v1694 = vld [vmem:[%s1686 + $0x38] sm:$0xff]
  %v1695 = vld [vmem:[%s1686 + $0x40] sm:$0xff]
  %v1696 = vld [vmem:[%s1686 + $0x48] sm:$0xff]
  %v1697 = vld [vmem:[%s1686 + $0x50] sm:$0xff]
  %v1698 = vld [vmem:[%s1686 + $0x58] sm:$0xff]
  %v1699 = vld [vmem:[%s1686 + $0x60] sm:$0xff]
  %v1700 = vld [vmem:[%s1686 + $0x68] sm:$0xff]
  %v1701 = vld [vmem:[%s1686 + $0x70] sm:$0xff]
  %v1702 = vld [vmem:[%s1686 + $0x78] sm:$0xff]
  %v1703 = vld [vmem:[%s1686 + $0x80] sm:$0xff]
  %v1704 = vld [vmem:[%s1686 + $0x88] sm:$0xff]
  %v1705 = vld [vmem:[%s1686 + $0x90] sm:$0xff]
  %v1706 = vld [vmem:[%s1686 + $0x98] sm:$0xff]
  %v1707 = vld [vmem:[%s1686 + $0xa0] sm:$0xff]
  %v1708 = vld [vmem:[%s1686 + $0xa8] sm:$0xff]
  %v1709 = vld [vmem:[%s1686 + $0xb0] sm:$0xff]
  %v1710 = vld [vmem:[%s1686 + $0xb8] sm:$0xff]
  %v1711 = vld [vmem:[%s1686 + $0xc0] sm:$0xff]
  %v1712 = vld [vmem:[%s1686 + $0xc8] sm:$0xff]
  %v1713 = vld [vmem:[%s1686 + $0xd0] sm:$0xff]
  %v1714 = vld [vmem:[%s1686 + $0xd8] sm:$0xff]
  %v1715 = vrot.slane %v1446, 4
  %v1716 = vrot.slane %v1448, 3
  %v1717 = vsel %vm1507, %v1716, %v1715
  %v1718 = vrot.slane %v1450, 2
  %v1719 = vsel %vm1510, %v1718, %v1717
  %v1720 = vrot.slane %v1452, 1
  %v1721 = vsel %vm1513, %v1720, %v1719
  %v1722 = vsel %vm1516, %v1454, %v1721
  %v1723 = vrot.slane %v1456, 7
  %v1724 = vsel %vm1519, %v1723, %v1722
  %v1725 = vrot.slane %v1458, 6
  %v1726 = vsel %vm1522, %v1725, %v1724
  %v1727 = vrot.slane %v1460, 5
  %v1728 = vsel %vm1525, %v1727, %v1726
  %v1729 = vrot.slane %v1447, 4
  %v1730 = vrot.slane %v1449, 3
  %v1731 = vsel %vm1507, %v1730, %v1729
  %v1732 = vrot.slane %v1451, 2
  %v1733 = vsel %vm1510, %v1732, %v1731
  %v1734 = vrot.slane %v1453, 1
  %v1735 = vsel %vm1513, %v1734, %v1733
  %v1736 = vsel %vm1516, %v1455, %v1735
  %v1737 = vrot.slane %v1457, 7
  %v1738 = vsel %vm1519, %v1737, %v1736
  %v1739 = vrot.slane %v1459, 6
  %v1740 = vsel %vm1522, %v1739, %v1738
  %v1741 = vrot.slane %v1461, 5
  %v1742 = vsel %vm1525, %v1741, %v1740
  %v1744 = vsel %vm1323, %v1742, 0
  %1746 = vmatpush.msra.mxu0 %v1702
  %1747 = vmatpush.msra.mxu0 %v1701
  %1748 = vmatpush.msra.mxu0 %v1700
  %1749 = vmatpush.msra.mxu0 %v1699
  %1750 = vmatpush.msra.mxu0 %v1698
  %1751 = vmatpush.msra.mxu0 %v1697
  %1752 = vmatpush.msra.mxu0 %v1696
  %1753 = vmatpush.msra.mxu0 %v1695
  %1754 = vmatpush.msra.mxu0 %v1694
  %1755 = vmatpush.msra.mxu0 %v1693
  %1756 = vmatpush.msra.mxu0 %v1692
  %1757 = vmatpush.msra.mxu0 %v1691
  %1758 = vmatpush.msra.mxu0 %v1690
  %1759 = vmatpush.msra.mxu0 %v1689
  %1760 = vmatpush.msra.mxu0 %v1688
  %1761 = vmatpush.msra.mxu0 %v1687
  %1762 = vmatmul.f32.gmra.mxu0 %v1728
  %v1763 = vpop.f32.mrf.mxu0
  %v1764 = vadd.f32 0.0, %v1763
  %1765 = vdwg.mxu0
  %1766 = vmatpush.msra.mxu0 0.0
  %1767 = vmatpush.msra.mxu0 0.0
  %1768 = vmatpush.msra.mxu0 0.0
  %1769 = vmatpush.msra.mxu0 0.0
  %1770 = vmatpush.msra.mxu0 %v1714
  %1771 = vmatpush.msra.mxu0 %v1713
  %1772 = vmatpush.msra.mxu0 %v1712
  %1773 = vmatpush.msra.mxu0 %v1711
  %1774 = vmatpush.msra.mxu0 %v1710
  %1775 = vmatpush.msra.mxu0 %v1709
  %1776 = vmatpush.msra.mxu0 %v1708
  %1777 = vmatpush.msra.mxu0 %v1707
  %1778 = vmatpush.msra.mxu0 %v1706
  %1779 = vmatpush.msra.mxu0 %v1705
  %1780 = vmatpush.msra.mxu0 %v1704
  %1781 = vmatpush.msra.mxu0 %v1703
  %1782 = vmatmul.f32.gmra.mxu0 %v1744
  %v1783 = vpop.f32.mrf.mxu0
  %v1784 = vadd.f32 %v1764, %v1783
  %1785 = vdwg.mxu0
  %v1786 = vadd.f32 %v1685, %v1784
  %s1787 = scalar_lea.vmem %s8, 672
  %v1788 = vld [vmem:[%s1787] sm:$0xff]
  %v1789 = vld [vmem:[%s1787 + $0x8] sm:$0xff]
  %v1790 = vld [vmem:[%s1787 + $0x10] sm:$0xff]
  %v1791 = vld [vmem:[%s1787 + $0x18] sm:$0xff]
  %v1792 = vld [vmem:[%s1787 + $0x20] sm:$0xff]
  %v1793 = vld [vmem:[%s1787 + $0x28] sm:$0xff]
  %v1794 = vld [vmem:[%s1787 + $0x30] sm:$0xff]
  %v1795 = vld [vmem:[%s1787 + $0x38] sm:$0xff]
  %v1796 = vld [vmem:[%s1787 + $0x40] sm:$0xff]
  %v1797 = vld [vmem:[%s1787 + $0x48] sm:$0xff]
  %v1798 = vld [vmem:[%s1787 + $0x50] sm:$0xff]
  %v1799 = vld [vmem:[%s1787 + $0x58] sm:$0xff]
  %v1800 = vld [vmem:[%s1787 + $0x60] sm:$0xff]
  %v1801 = vld [vmem:[%s1787 + $0x68] sm:$0xff]
  %v1802 = vld [vmem:[%s1787 + $0x70] sm:$0xff]
  %v1803 = vld [vmem:[%s1787 + $0x78] sm:$0xff]
  %v1804 = vld [vmem:[%s1787 + $0x80] sm:$0xff]
  %v1805 = vld [vmem:[%s1787 + $0x88] sm:$0xff]
  %v1806 = vld [vmem:[%s1787 + $0x90] sm:$0xff]
  %v1807 = vld [vmem:[%s1787 + $0x98] sm:$0xff]
  %v1808 = vld [vmem:[%s1787 + $0xa0] sm:$0xff]
  %v1809 = vld [vmem:[%s1787 + $0xa8] sm:$0xff]
  %v1810 = vld [vmem:[%s1787 + $0xb0] sm:$0xff]
  %v1811 = vld [vmem:[%s1787 + $0xb8] sm:$0xff]
  %v1812 = vld [vmem:[%s1787 + $0xc0] sm:$0xff]
  %v1813 = vld [vmem:[%s1787 + $0xc8] sm:$0xff]
  %v1814 = vld [vmem:[%s1787 + $0xd0] sm:$0xff]
  %v1815 = vld [vmem:[%s1787 + $0xd8] sm:$0xff]
  %v1816 = vrot.slane %v1446, 6
  %v1817 = vrot.slane %v1448, 5
  %v1818 = vsel %vm1507, %v1817, %v1816
  %v1819 = vrot.slane %v1450, 4
  %v1820 = vsel %vm1510, %v1819, %v1818
  %v1821 = vrot.slane %v1452, 3
  %v1822 = vsel %vm1513, %v1821, %v1820
  %v1823 = vrot.slane %v1454, 2
  %v1824 = vsel %vm1516, %v1823, %v1822
  %v1825 = vrot.slane %v1456, 1
  %v1826 = vsel %vm1519, %v1825, %v1824
  %v1827 = vsel %vm1522, %v1458, %v1826
  %v1828 = vrot.slane %v1460, 7
  %v1829 = vsel %vm1525, %v1828, %v1827
  %v1830 = vrot.slane %v1447, 6
  %v1831 = vrot.slane %v1449, 5
  %v1832 = vsel %vm1507, %v1831, %v1830
  %v1833 = vrot.slane %v1451, 4
  %v1834 = vsel %vm1510, %v1833, %v1832
  %v1835 = vrot.slane %v1453, 3
  %v1836 = vsel %vm1513, %v1835, %v1834
  %v1837 = vrot.slane %v1455, 2
  %v1838 = vsel %vm1516, %v1837, %v1836
  %v1839 = vrot.slane %v1457, 1
  %v1840 = vsel %vm1519, %v1839, %v1838
  %v1841 = vsel %vm1522, %v1459, %v1840
  %v1842 = vrot.slane %v1461, 7
  %v1843 = vsel %vm1525, %v1842, %v1841
  %v1845 = vsel %vm1323, %v1843, 0
  %1847 = vmatpush.msra.mxu0 %v1803
  %1848 = vmatpush.msra.mxu0 %v1802
  %1849 = vmatpush.msra.mxu0 %v1801
  %1850 = vmatpush.msra.mxu0 %v1800
  %1851 = vmatpush.msra.mxu0 %v1799
  %1852 = vmatpush.msra.mxu0 %v1798
  %1853 = vmatpush.msra.mxu0 %v1797
  %1854 = vmatpush.msra.mxu0 %v1796
  %1855 = vmatpush.msra.mxu0 %v1795
  %1856 = vmatpush.msra.mxu0 %v1794
  %1857 = vmatpush.msra.mxu0 %v1793
  %1858 = vmatpush.msra.mxu0 %v1792
  %1859 = vmatpush.msra.mxu0 %v1791
  %1860 = vmatpush.msra.mxu0 %v1790
  %1861 = vmatpush.msra.mxu0 %v1789
  %1862 = vmatpush.msra.mxu0 %v1788
  %1863 = vmatmul.f32.gmra.mxu0 %v1829
  %v1864 = vpop.f32.mrf.mxu0
  %v1865 = vadd.f32 0.0, %v1864
  %1866 = vdwg.mxu0
  %1867 = vmatpush.msra.mxu0 0.0
  %1868 = vmatpush.msra.mxu0 0.0
  %1869 = vmatpush.msra.mxu0 0.0
  %1870 = vmatpush.msra.mxu0 0.0
  %1871 = vmatpush.msra.mxu0 %v1815
  %1872 = vmatpush.msra.mxu0 %v1814
  %1873 = vmatpush.msra.mxu0 %v1813
  %1874 = vmatpush.msra.mxu0 %v1812
  %1875 = vmatpush.msra.mxu0 %v1811
  %1876 = vmatpush.msra.mxu0 %v1810
  %1877 = vmatpush.msra.mxu0 %v1809
  %1878 = vmatpush.msra.mxu0 %v1808
  %1879 = vmatpush.msra.mxu0 %v1807
  %1880 = vmatpush.msra.mxu0 %v1806
  %1881 = vmatpush.msra.mxu0 %v1805
  %1882 = vmatpush.msra.mxu0 %v1804
  %1883 = vmatmul.f32.gmra.mxu0 %v1845
  %v1884 = vpop.f32.mrf.mxu0
  %v1885 = vadd.f32 %v1865, %v1884
  %1886 = vdwg.mxu0
  %v1887 = vadd.f32 %v1786, %v1885
  %v1888 = vmax.f32 %v1887, 0.0
  %v1889 = vld [vmem:[%s11] sm:$0xff]
  %v1890 = vld [vmem:[%s11 + $0x8] sm:$0xff]
  %v1891 = vld [vmem:[%s11 + $0x10] sm:$0xff]
  %v1892 = vld [vmem:[%s11 + $0x18] sm:$0xff]
  %v1893 = vld [vmem:[%s12] sm:$0x1]
  %v1895 = vperm.slane %v1893, 0
  %vm1897 = vcmask 261120
  %v1899 = vsel %vm1897, %v1888, 0
  %1901 = vmatpush.msra.mxu0 0.0
  %1902 = vmatpush.msra.mxu0 0.0
  %1903 = vmatpush.msra.mxu0 0.0
  %1904 = vmatpush.msra.mxu0 0.0
  %1905 = vmatpush.msra.mxu0 0.0
  %1906 = vmatpush.msra.mxu0 0.0
  %1907 = vmatpush.msra.mxu0 0.0
  %1908 = vmatpush.msra.mxu0 0.0
  %1909 = vmatpush.msra.mxu0 0.0
  %1910 = vmatpush.msra.mxu0 0.0
  %1911 = vmatpush.msra.mxu0 0.0
  %1912 = vmatpush.msra.mxu0 0.0
  %1913 = vmatpush.msra.mxu0 %v1892
  %1914 = vmatpush.msra.mxu0 %v1891
  %1915 = vmatpush.msra.mxu0 %v1890
  %1916 = vmatpush.msra.mxu0 %v1889
  %1917 = vmatmul.f32.gmra.mxu0 %v1899
  %v1918 = vpop.f32.mrf.mxu0
  %v1919 = vadd.f32 %v1895, %v1918
  %1920 = vdwg.mxu0
  %vm1921 = vcmask 31744
  %1922 = vst.msk [vmem:[%s13] sm:$0xff] %vm1921, %v1919
  // Predicated region
  $region54: #{mul_chan_convnet_pallas.1} parent=0 // pred_check
    _
  $region55: #{mul_chan_convnet_pallas.1} parent=0 // pred_check_branch
    %1924 = sbr.rel (0) target = $region57
  $region56: #{mul_chan_convnet_pallas.1} parent=0 // pred_region
    _
  $region57: #{mul_chan_convnet_pallas.1} parent=0 // pred_fallthru
    _
  // Predicated region
  $region58: #{mul_chan_convnet_pallas.1} parent=0 // pred_check
    _
  $region59: #{mul_chan_convnet_pallas.1} parent=0 // pred_check_branch
    %1926 = sbr.rel (0) target = $region61
  $region60: #{mul_chan_convnet_pallas.1} parent=0 // pred_region
    _
  $region61: #{mul_chan_convnet_pallas.1} parent=0 // pred_fallthru
    _

</llo_original>
